<compile_context>
chip_gen: v5e
topology: v5e:2x2
jax: 0.10.0
libtpu: 0.0.40
codegen_flags: <defaults>
</compile_context>

<pallas_src>
import functools
import math

import jax
import jax.numpy as jnp
from jax import lax
from jax.experimental import pallas as pl
from jax.experimental.pallas import tpu as pltpu


# ----------------------------------------------------------------------------
# Kernel
# ----------------------------------------------------------------------------
def _concat_attn_kernel(hproj_ref, enc_ref, we_ref, v_ref, out_ref, *,
                        valid_len):
    """Grid = (num_B_tiles, num_S_tiles); S is the inner ("arbitrary") axis.

    hproj_ref : (tB, H)  f32   cached hidden @ W_hid + bias (computed in wrapper)
    enc_ref   : (tS, tB, H)    seq-major encoder tile (bf16 by default)
    we_ref    : (H, H)         encoder half of the concat Linear (in x out)
    v_ref     : (1, H)  f32
    out_ref   : (tB, Spad) f32 resident across the S grid axis
    valid_len : static int     true S (columns >= valid_len are padding)
    """
    si = pl.program_id(1)
    tS, tB, H = enc_ref.shape

    enc = enc_ref[...]                                          # (tS, tB, H)
    if tB % 8 == 0 and H % 128 == 0:
        # Layout-free merge of leading dims -> one tall MXU matmul.
        proj = jnp.dot(enc.reshape(tS * tB, H), we_ref[...],
                       preferred_element_type=jnp.float32).reshape(tS, tB, H)
    else:
        # Tiny / unaligned tiles: batched contraction.
        proj = lax.dot_general(enc, we_ref[...],
                               dimension_numbers=(((2,), (0,)), ((), ())),
                               preferred_element_type=jnp.float32)

    act = jnp.tanh(proj + hproj_ref[...][None, :, :])           # (tS, tB, H) f32

    # v projection (H -> 1) as a lane reduction, then (tS, tB) -> (tB, tS).
    scores = jnp.sum(act * v_ref[...][None, :, :], axis=-1)     # (tS, tB)
    start = pl.multiple_of(si * tS, tS)                         # tS % 128 == 0
    out_ref[:, pl.ds(start, tS)] = scores.T                     # lane-dense store

    # Last S step: masked softmax over the full resident (tB, Spad) block.
    @pl.when(si == pl.num_programs(1) - 1)
    def _():
        s_all = out_ref[...]                                    # (tB, Spad)
        if valid_len < out_ref.shape[1]:
            col = lax.broadcasted_iota(jnp.int32, s_all.shape, 1)
            s_all = jnp.where(col < valid_len, s_all, -jnp.inf)
        m = jnp.max(s_all, axis=-1, keepdims=True)
        e = jnp.exp(s_all - m)
        out_ref[...] = e / jnp.sum(e, axis=-1, keepdims=True)   # exact divide


# ----------------------------------------------------------------------------
# Tile selection
# ----------------------------------------------------------------------------
# Per-step live-VMEM budget for the enc tile: double-buffered enc input plus
# the two f32 intermediates (proj, act) of the same shape.
_ENC_TILE_BUDGET_BYTES = 24 << 20


def _num_tensorcores_per_chip():
    try:
        kind = jax.devices()[0].device_kind.lower()
    except Exception:
        return 1
    # v7x has 2 TensorCores per chip; v5e / v6e have 1.
    return 2 if "v7" in kind else 1


def _pick_tiles(B, Spad, H, enc_itemsize):
    """Choose (tB, tS).  tB is B (contiguous DMA on single-TC chips) or B/2
    (two 'parallel' programs on v7x); tS is the largest multiple of 128 that
    divides Spad and keeps the per-step footprint under the budget."""
    per_elem = 2 * enc_itemsize + 8            # 2x buffered enc + 2 f32 temps
    max_elems = max(1, _ENC_TILE_BUDGET_BYTES // per_elem)

    ncores = _num_tensorcores_per_chip()
    tB = B
    if ncores > 1 and B % (8 * ncores) == 0:
        tB = B // ncores                       # feed both TensorCores
    # Shrink tB (keeping multiples of 8 that divide B) if even a minimal
    # 128-row tile would blow the budget (large-B robustness).
    while tB % 16 == 0 and B % (tB // 2) == 0 and tB * H * 128 > max_elems:
        tB //= 2

    m = Spad // 128
    cap_rows = max(1, max_elems // max(1, tB * H))
    cap_blocks = max(1, min(m, cap_rows // 128))
    k = max(d for d in range(1, cap_blocks + 1) if m % d == 0)
    return tB, 128 * k


# ----------------------------------------------------------------------------
# Wrapper
# ----------------------------------------------------------------------------
def attention_concat(hidden, encoder_output, attn_w, attn_b, v_w,
                     matmul_dtype=jnp.bfloat16):
    """hidden: (B, H), encoder_output: (S, B, H)  ->  (B, 1, S)."""
    S, B, H = encoder_output.shape
    assert hidden.shape == (B, H)

    # nn.Linear(2H, H): weight (H, 2H); cat order is [hidden, encoder_output].
    w_hid = attn_w[:, :H].astype(jnp.float32)            # (H_out, H_in)
    w_enc = attn_w[:, H:].T.astype(matmul_dtype)         # (H_in, H_out)
    bias = attn_b.astype(jnp.float32)
    v = v_w.reshape(1, H).astype(jnp.float32)            # nn.Linear(H, 1, bias=False)

    # Hidden projection hoisted out of the kernel (tiny, f32, off critical path).
    hproj = hidden.astype(jnp.float32) @ w_hid.T + bias  # (B, H) f32

    # Encoder stream: consumed seq-major (no transpose); pad S to a multiple of
    # 128 so score stores are lane-dense and tS never collapses to odd divisors.
    enc = encoder_output.astype(matmul_dtype)
    Spad = pl.cdiv(S, 128) * 128
    if Spad != S:
        enc = jnp.pad(enc, ((0, Spad - S), (0, 0), (0, 0)))

    tB, tS = _pick_tiles(B, Spad, H, jnp.dtype(matmul_dtype).itemsize)
    grid = (B // tB, Spad // tS)

    probs = pl.pallas_call(
        functools.partial(_concat_attn_kernel, valid_len=S),
        out_shape=jax.ShapeDtypeStruct((B, Spad), jnp.float32),
        grid_spec=pltpu.PrefetchScalarGridSpec(
            num_scalar_prefetch=0,
            grid=grid,
            in_specs=[
                pl.BlockSpec((tB, H), lambda bi, si: (bi, 0)),          # hproj
                pl.BlockSpec((tS, tB, H), lambda bi, si: (si, bi, 0)),  # encoder (S, B, H)
                pl.BlockSpec((H, H), lambda bi, si: (0, 0)),            # W_enc
                pl.BlockSpec((1, H), lambda bi, si: (0, 0)),            # v
            ],
            out_specs=pl.BlockSpec((tB, Spad), lambda bi, si: (bi, 0)), # resident over S
        ),
        compiler_params=pltpu.CompilerParams(
            dimension_semantics=("parallel", "arbitrary"),
            vmem_limit_bytes=48 << 20),
    )(hproj, enc, w_enc, v)

    return probs[:, :S][:, None, :]                       # (B, 1, S)


def attention_concat_ref(hidden, encoder_output, attn_w, attn_b, v_w):
    """Pure-JAX f32 reference matching the PyTorch forward exactly."""
    S, B, H = encoder_output.shape
    hidden_rep = jnp.broadcast_to(hidden[None, :, :], (S, B, H))
    cat = jnp.concatenate([hidden_rep, encoder_output], axis=-1)       # (S, B, 2H)
    attn = jnp.tanh(cat @ attn_w.T + attn_b)                           # (S, B, H)
    scores = (attn @ v_w.T)[..., 0].T                                  # (B, S)
    return jax.nn.softmax(scores, axis=-1)[:, None, :]                 # (B, 1, S)


if __name__ == "__main__":
    def make_case(B, S, H, seed):
        key = jax.random.fold_in(jax.random.PRNGKey(0), seed)
        k_hid, k_enc, k_w, k_v = jax.random.split(key, 4)
        # xavier_normal_ scales matching the PyTorch __init__
        attn_w = jax.random.normal(k_w, (H, 2 * H), jnp.float32) * math.sqrt(2.0 / (3 * H))
        attn_b = jnp.zeros((H,), jnp.float32)
        v_w = jax.random.normal(k_v, (1, H), jnp.float32) * math.sqrt(2.0 / (H + 1))
        hidden = jax.random.normal(k_hid, (B, H), jnp.float32)
        enc = jax.random.normal(k_enc, (S, B, H), jnp.float32)
        return hidden, enc, attn_w, attn_b, v_w

    # (2, 8, 32): spec-sized, exercises padding + tiny-tile fallback (f32 & bf16)
    # (8, 200, 128): ragged S -> pad + masked softmax, aligned MXU path
    # (16, 1024, 128): S tiling / resident-output softmax, possible B split on v7x
    cases = [
        (2, 8, 32, jnp.float32),
        (2, 8, 32, jnp.bfloat16),
        (8, 200, 128, jnp.bfloat16),
        (16, 1024, 128, jnp.bfloat16),
    ]
    for case_id, (B, S, H, dt) in enumerate(cases):
        args = make_case(B, S, H, case_id)
        out = jax.block_until_ready(attention_concat(*args, matmul_dtype=dt))
        ref = attention_concat_ref(*args)
        assert out.shape == (B, 1, S), (out.shape, (B, 1, S))
        # bf16 enc/W_enc introduce ~1e-2-level relative error on the scores;
        # the softmax itself is exact f32 (exact divide in the finalize).
        assert jnp.allclose(out, ref, atol=1e-2, rtol=1e-2), (B, S, H, dt)
        assert jnp.allclose(jnp.sum(out, axis=-1), 1.0, atol=1e-3), (B, S, H, dt)

    print("KERNEL_OK")
</pallas_src>

<mosaic_0001>
module attributes {stable_mosaic.version = 11 : i64} {
  func.func @_concat_attn_kernel(%arg0: i32, %arg1: i32, %arg2: memref<2x32xf32, #tpu.memory_space<vmem>>, %arg3: memref<128x2x32xf32, #tpu.memory_space<vmem>>, %arg4: memref<32x32xf32, #tpu.memory_space<vmem>>, %arg5: memref<1x32xf32, #tpu.memory_space<vmem>>, %arg6: memref<2x128xf32, #tpu.memory_space<vmem>>) attributes {dimension_semantics = [#tpu.dimension_semantics<parallel>, #tpu.dimension_semantics<arbitrary>], iteration_bounds = array<i64: 1, 1>, scalar_prefetch = 0 : i64, scratch_operands = 0 : i64, tpu.core_type = #tpu.core_type<tc>, window_params = [{transform_indices = @transform_0, window_bounds = array<i64: 2, 32>}, {transform_indices = @transform_1, window_bounds = array<i64: 128, 2, 32>}, {pipeline_mode = #tpu.pipeline_mode<synchronous>, transform_indices = @transform_2, window_bounds = array<i64: 32, 32>}, {pipeline_mode = #tpu.pipeline_mode<synchronous>, transform_indices = @transform_3, window_bounds = array<i64: 1, 32>}, {transform_indices = @transform_4, window_bounds = array<i64: 2, 128>}]} {
    %c0 = arith.constant 0 : index
    %c0_0 = arith.constant 0 : index
    %c0_1 = arith.constant 0 : index
    %0 = vector.load %arg3[%c0, %c0_0, %c0_1] : memref<128x2x32xf32, #tpu.memory_space<vmem>>, vector<128x2x32xf32>
    %c0_2 = arith.constant 0 : index
    %c0_3 = arith.constant 0 : index
    %1 = vector.load %arg4[%c0_2, %c0_3] : memref<32x32xf32, #tpu.memory_space<vmem>>, vector<32x32xf32>
    %cst = arith.constant dense<0.000000e+00> : vector<128x2x32xf32>
    %2 = tpu.matmul %0, %1, %cst {dimension_numbers = #tpu.dot_dimension_numbers<[2], [0], [0, 1], [1], [0, 0, 0, 1, 1, 1], [], []>} : vector<128x2x32xf32>, vector<32x32xf32>, vector<128x2x32xf32> -> vector<128x2x32xf32>
    %c0_4 = arith.constant 0 : index
    %c0_5 = arith.constant 0 : index
    %3 = vector.load %arg2[%c0_4, %c0_5] : memref<2x32xf32, #tpu.memory_space<vmem>>, vector<2x32xf32>
    %4 = vector.shape_cast %3 : vector<2x32xf32> to vector<1x2x32xf32>
    %5 = vector.broadcast %4 : vector<1x2x32xf32> to vector<128x2x32xf32>
    %6 = arith.addf %2, %5 : vector<128x2x32xf32>
    %7 = math.tanh %6 : vector<128x2x32xf32>
    %c0_6 = arith.constant 0 : index
    %c0_7 = arith.constant 0 : index
    %8 = vector.load %arg5[%c0_6, %c0_7] : memref<1x32xf32, #tpu.memory_space<vmem>>, vector<1x32xf32>
    %9 = vector.shape_cast %8 : vector<1x32xf32> to vector<1x1x32xf32>
    %10 = vector.broadcast %9 : vector<1x1x32xf32> to vector<128x2x32xf32>
    %11 = arith.mulf %7, %10 : vector<128x2x32xf32>
    %cst_8 = arith.constant dense<0.000000e+00> : vector<128x2xf32>
    %12 = vector.multi_reduction <add>, %11, %cst_8 [2] : vector<128x2x32xf32> to vector<128x2xf32>
    %c128_i32 = arith.constant 128 : i32
    %13 = arith.muli %arg1, %c128_i32 : i32
    %14 = tpu.assume_multiple %13, 128 : i32
    %15 = tpu.transpose %12, [1, 0] : vector<128x2xf32> -> vector<2x128xf32>
    %c0_9 = arith.constant 0 : index
    %16 = arith.index_cast %14 : i32 to index
    %17 = vector.load %arg6[%c0_9, %16] : memref<2x128xf32, #tpu.memory_space<vmem>>, vector<2x128xf32>
    tpu.vector_store %arg6[%c0_9, %16], %15 {strides = array<i32>} : memref<2x128xf32, #tpu.memory_space<vmem>>, vector<2x128xf32>,
    %c0_i32 = arith.constant 0 : i32
    %18 = arith.cmpi eq, %arg1, %c0_i32 : i32
    %19 = arith.extui %18 : i1 to i32
    %c0_i32_10 = arith.constant 0 : i32
    %20 = arith.cmpi ne, %19, %c0_i32_10 : i32
    scf.if %20 {
      %c0_11 = arith.constant 0 : index
      %c0_12 = arith.constant 0 : index
      %21 = vector.load %arg6[%c0_11, %c0_12] : memref<2x128xf32, #tpu.memory_space<vmem>>, vector<2x128xf32>
      %22 = tpu.iota {dimensions = array<i32: 1>} : vector<2x128xi32>
      %c8_i32 = arith.constant 8 : i32
      %23 = vector.broadcast %c8_i32 : i32 to vector<2x128xi32>
      %24 = arith.cmpi slt, %22, %23 : vector<2x128xi32>
      %cst_13 = arith.constant 0xFF800000 : f32
      %25 = vector.broadcast %cst_13 : f32 to vector<2x128xf32>
      %26 = arith.select %24, %21, %25 : vector<2x128xi1>, vector<2x128xf32>
      %cst_14 = arith.constant dense<0xFF800000> : vector<2xf32>
      %27 = vector.multi_reduction <maximumf>, %26, %cst_14 [1] : vector<2x128xf32> to vector<2xf32>
      %28 = vector.shape_cast %27 : vector<2xf32> to vector<2x1xf32>
      %29 = vector.broadcast %28 : vector<2x1xf32> to vector<2x128xf32>
      %30 = arith.subf %26, %29 : vector<2x128xf32>
      %31 = math.exp %30 : vector<2x128xf32>
      %cst_15 = arith.constant dense<0.000000e+00> : vector<2xf32>
      %32 = vector.multi_reduction <add>, %31, %cst_15 [1] : vector<2x128xf32> to vector<2xf32>
      %33 = vector.shape_cast %32 : vector<2xf32> to vector<2x1xf32>
      %34 = vector.broadcast %33 : vector<2x1xf32> to vector<2x128xf32>
      %35 = arith.divf %31, %34 : vector<2x128xf32>
      %c0_16 = arith.constant 0 : index
      %c0_17 = arith.constant 0 : index
      %36 = vector.load %arg6[%c0_16, %c0_17] : memref<2x128xf32, #tpu.memory_space<vmem>>, vector<2x128xf32>
      tpu.vector_store %arg6[%c0_16, %c0_17], %35 {strides = array<i32>} : memref<2x128xf32, #tpu.memory_space<vmem>>, vector<2x128xf32>,
    } else {
    }
    return
  }
  func.func @transform_0(%arg0: i32, %arg1: i32) -> (i32, i32) {
    %c0_i32 = arith.constant 0 : i32
    %c0_i32_0 = arith.constant 0 : i32
    return %arg0, %c0_i32 : i32, i32
  }
  func.func @transform_1(%arg0: i32, %arg1: i32) -> (i32, i32, i32) {
    %c0_i32 = arith.constant 0 : i32
    %c0_i32_0 = arith.constant 0 : i32
    return %arg1, %arg0, %c0_i32 : i32, i32, i32
  }
  func.func @transform_2(%arg0: i32, %arg1: i32) -> (i32, i32) {
    %c0_i32 = arith.constant 0 : i32
    %c0_i32_0 = arith.constant 0 : i32
    %c0_i32_1 = arith.constant 0 : i32
    return %c0_i32, %c0_i32_0 : i32, i32
  }
  func.func @transform_3(%arg0: i32, %arg1: i32) -> (i32, i32) {
    %c0_i32 = arith.constant 0 : i32
    %c0_i32_0 = arith.constant 0 : i32
    %c0_i32_1 = arith.constant 0 : i32
    return %c0_i32, %c0_i32_0 : i32, i32
  }
  func.func @transform_4(%arg0: i32, %arg1: i32) -> (i32, i32) {
    %c0_i32 = arith.constant 0 : i32
    %c0_i32_0 = arith.constant 0 : i32
    return %arg0, %c0_i32 : i32, i32
  }
}

</mosaic_0001>

<llo_original>
// kernel: tpu_custom_call.1
$region0: #{tpu_custom_call.1}
  #allocation0 [shape = 'u32[]', space=smem, size = 0x4, offset = 0x4, fixed_abs, tag = 'smem constant byte address 0x4 - core index']
  #allocation1 [shape = 'u32[72,128]{1,0:T(1,128)}', space=vmem, size = 0x9000, scoped, tag = 'internal scratch']
  %s0 = inlined_call_operand.vmem [shape: f32[2,32], index: 0, kind: input, shape index: {}]
  %s1 = inlined_call_operand.vmem [shape: f32[128,2,32], index: 1, kind: input, shape index: {}]
  %s2 = inlined_call_operand.vmem [shape: f32[32,32], index: 2, kind: input, shape index: {}]
  %s3 = inlined_call_operand.vmem [shape: f32[1,32], index: 3, kind: input, shape index: {}]
  %s4 = inlined_call_operand.hbm [shape: f32[2,128], index: 4, kind: output, shape index: {}]
  %s5 = sld [smem:[#allocation0]]
  $region30: #{tpu_custom_call.1} parent=0
    _
  %s7 = ssub.s32 1, %s5
  %s8 = scalar_select 0, %s7, %s5
  $region1: #{tpu_custom_call.1} parent=0
    #allocation2 [shape = 'u8[1024]{0}', space=vmem, size = 0x400, scoped, tag = 'output window, operand 0, single buffered']
    #allocation3 [shape = 's32[1]{0}', space=sflag, size = 0x4, scoped, tag = 'scoped memory for tpu_custom_call.1']
    %9 = vsyncpa [#allocation3], 0
    // Predicated region
    $region2: #{tpu_custom_call.1} parent=1 // pred_check
      _
    $region3: #{tpu_custom_call.1} parent=1 // pred_check_branch
      %11 = sbr.rel (0) target = $region5
    $region4: #{tpu_custom_call.1} parent=1 // pred_region
      _
    $region5: #{tpu_custom_call.1} parent=1 // pred_fallthru
      _
    // Predicated region
    $region6: #{tpu_custom_call.1} parent=1 // pred_check
      _
    $region7: #{tpu_custom_call.1} parent=1 // pred_check_branch
      %13 = sbr.rel (0) target = $region9
    $region8: #{tpu_custom_call.1} parent=1 // pred_region
      _
    $region9: #{tpu_custom_call.1} parent=1 // pred_fallthru
      _
    // Predicated region
    $region10: #{tpu_custom_call.1} parent=1 // pred_check
      _
    $region11: #{tpu_custom_call.1} parent=1 // pred_check_branch
      %15 = sbr.rel (0) target = $region13
    $region12: #{tpu_custom_call.1} parent=1 // pred_region
      _
    $region13: #{tpu_custom_call.1} parent=1 // pred_fallthru
      _
    // Predicated region
    $region14: #{tpu_custom_call.1} parent=1 // pred_check
      _
    $region15: #{tpu_custom_call.1} parent=1 // pred_check_branch
      %17 = sbr.rel (0) target = $region17
    $region16: #{tpu_custom_call.1} parent=1 // pred_region
      _
    $region17: #{tpu_custom_call.1} parent=1 // pred_fallthru
      _
    %v18 = vld [vmem:[%s1] sm:$0x3]
    %v19 = vld [vmem:[%s1 + $0x2] sm:$0x3]
    %v20 = vld [vmem:[%s1 + $0x4] sm:$0x3]
    %v21 = vld [vmem:[%s1 + $0x6] sm:$0x3]
    %v22 = vld [vmem:[%s1 + $0x8] sm:$0x3]
    %v23 = vld [vmem:[%s1 + $0xa] sm:$0x3]
    %v24 = vld [vmem:[%s1 + $0xc] sm:$0x3]
    %v25 = vld [vmem:[%s1 + $0xe] sm:$0x3]
    %v26 = vld [vmem:[%s1 + $0x10] sm:$0x3]
    %v27 = vld [vmem:[%s1 + $0x12] sm:$0x3]
    %v28 = vld [vmem:[%s1 + $0x14] sm:$0x3]
    %v29 = vld [vmem:[%s1 + $0x16] sm:$0x3]
    %v30 = vld [vmem:[%s1 + $0x18] sm:$0x3]
    %v31 = vld [vmem:[%s1 + $0x1a] sm:$0x3]
    %v32 = vld [vmem:[%s1 + $0x1c] sm:$0x3]
    %v33 = vld [vmem:[%s1 + $0x1e] sm:$0x3]
    %v34 = vld [vmem:[%s1 + $0x20] sm:$0x3]
    %v35 = vld [vmem:[%s1 + $0x22] sm:$0x3]
    %v36 = vld [vmem:[%s1 + $0x24] sm:$0x3]
    %v37 = vld [vmem:[%s1 + $0x26] sm:$0x3]
    %v38 = vld [vmem:[%s1 + $0x28] sm:$0x3]
    %v39 = vld [vmem:[%s1 + $0x2a] sm:$0x3]
    %v40 = vld [vmem:[%s1 + $0x2c] sm:$0x3]
    %v41 = vld [vmem:[%s1 + $0x2e] sm:$0x3]
    %v42 = vld [vmem:[%s1 + $0x30] sm:$0x3]
    %v43 = vld [vmem:[%s1 + $0x32] sm:$0x3]
    %v44 = vld [vmem:[%s1 + $0x34] sm:$0x3]
    %v45 = vld [vmem:[%s1 + $0x36] sm:$0x3]
    %v46 = vld [vmem:[%s1 + $0x38] sm:$0x3]
    %v47 = vld [vmem:[%s1 + $0x3a] sm:$0x3]
    %v48 = vld [vmem:[%s1 + $0x3c] sm:$0x3]
    %v49 = vld [vmem:[%s1 + $0x3e] sm:$0x3]
    %v50 = vld [vmem:[%s1 + $0x40] sm:$0x3]
    %v51 = vld [vmem:[%s1 + $0x42] sm:$0x3]
    %v52 = vld [vmem:[%s1 + $0x44] sm:$0x3]
    %v53 = vld [vmem:[%s1 + $0x46] sm:$0x3]
    %v54 = vld [vmem:[%s1 + $0x48] sm:$0x3]
    %v55 = vld [vmem:[%s1 + $0x4a] sm:$0x3]
    %v56 = vld [vmem:[%s1 + $0x4c] sm:$0x3]
    %v57 = vld [vmem:[%s1 + $0x4e] sm:$0x3]
    %v58 = vld [vmem:[%s1 + $0x50] sm:$0x3]
    %v59 = vld [vmem:[%s1 + $0x52] sm:$0x3]
    %v60 = vld [vmem:[%s1 + $0x54] sm:$0x3]
    %v61 = vld [vmem:[%s1 + $0x56] sm:$0x3]
    %v62 = vld [vmem:[%s1 + $0x58] sm:$0x3]
    %v63 = vld [vmem:[%s1 + $0x5a] sm:$0x3]
    %v64 = vld [vmem:[%s1 + $0x5c] sm:$0x3]
    %v65 = vld [vmem:[%s1 + $0x5e] sm:$0x3]
    %v66 = vld [vmem:[%s1 + $0x60] sm:$0x3]
    %v67 = vld [vmem:[%s1 + $0x62] sm:$0x3]
    %v68 = vld [vmem:[%s1 + $0x64] sm:$0x3]
    %v69 = vld [vmem:[%s1 + $0x66] sm:$0x3]
    %v70 = vld [vmem:[%s1 + $0x68] sm:$0x3]
    %v71 = vld [vmem:[%s1 + $0x6a] sm:$0x3]
    %v72 = vld [vmem:[%s1 + $0x6c] sm:$0x3]
    %v73 = vld [vmem:[%s1 + $0x6e] sm:$0x3]
    %v74 = vld [vmem:[%s1 + $0x70] sm:$0x3]
    %v75 = vld [vmem:[%s1 + $0x72] sm:$0x3]
    %v76 = vld [vmem:[%s1 + $0x74] sm:$0x3]
    %v77 = vld [vmem:[%s1 + $0x76] sm:$0x3]
    %v78 = vld [vmem:[%s1 + $0x78] sm:$0x3]
    %v79 = vld [vmem:[%s1 + $0x7a] sm:$0x3]
    %v80 = vld [vmem:[%s1 + $0x7c] sm:$0x3]
    %v81 = vld [vmem:[%s1 + $0x7e] sm:$0x3]
    %v82 = vld [vmem:[%s1 + $0x80] sm:$0x3]
    %v83 = vld [vmem:[%s1 + $0x82] sm:$0x3]
    %v84 = vld [vmem:[%s1 + $0x84] sm:$0x3]
    %v85 = vld [vmem:[%s1 + $0x86] sm:$0x3]
    %v86 = vld [vmem:[%s1 + $0x88] sm:$0x3]
    %v87 = vld [vmem:[%s1 + $0x8a] sm:$0x3]
    %v88 = vld [vmem:[%s1 + $0x8c] sm:$0x3]
    %v89 = vld [vmem:[%s1 + $0x8e] sm:$0x3]
    %v90 = vld [vmem:[%s1 + $0x90] sm:$0x3]
    %v91 = vld [vmem:[%s1 + $0x92] sm:$0x3]
    %v92 = vld [vmem:[%s1 + $0x94] sm:$0x3]
    %v93 = vld [vmem:[%s1 + $0x96] sm:$0x3]
    %v94 = vld [vmem:[%s1 + $0x98] sm:$0x3]
    %v95 = vld [vmem:[%s1 + $0x9a] sm:$0x3]
    %v96 = vld [vmem:[%s1 + $0x9c] sm:$0x3]
    %v97 = vld [vmem:[%s1 + $0x9e] sm:$0x3]
    %v98 = vld [vmem:[%s1 + $0xa0] sm:$0x3]
    %v99 = vld [vmem:[%s1 + $0xa2] sm:$0x3]
    %v100 = vld [vmem:[%s1 + $0xa4] sm:$0x3]
    %v101 = vld [vmem:[%s1 + $0xa6] sm:$0x3]
    %v102 = vld [vmem:[%s1 + $0xa8] sm:$0x3]
    %v103 = vld [vmem:[%s1 + $0xaa] sm:$0x3]
    %v104 = vld [vmem:[%s1 + $0xac] sm:$0x3]
    %v105 = vld [vmem:[%s1 + $0xae] sm:$0x3]
    %v106 = vld [vmem:[%s1 + $0xb0] sm:$0x3]
    %v107 = vld [vmem:[%s1 + $0xb2] sm:$0x3]
    %v108 = vld [vmem:[%s1 + $0xb4] sm:$0x3]
    %v109 = vld [vmem:[%s1 + $0xb6] sm:$0x3]
    %v110 = vld [vmem:[%s1 + $0xb8] sm:$0x3]
    %v111 = vld [vmem:[%s1 + $0xba] sm:$0x3]
    %v112 = vld [vmem:[%s1 + $0xbc] sm:$0x3]
    %v113 = vld [vmem:[%s1 + $0xbe] sm:$0x3]
    %v114 = vld [vmem:[%s1 + $0xc0] sm:$0x3]
    %v115 = vld [vmem:[%s1 + $0xc2] sm:$0x3]
    %v116 = vld [vmem:[%s1 + $0xc4] sm:$0x3]
    %v117 = vld [vmem:[%s1 + $0xc6] sm:$0x3]
    %v118 = vld [vmem:[%s1 + $0xc8] sm:$0x3]
    %v119 = vld [vmem:[%s1 + $0xca] sm:$0x3]
    %v120 = vld [vmem:[%s1 + $0xcc] sm:$0x3]
    %v121 = vld [vmem:[%s1 + $0xce] sm:$0x3]
    %v122 = vld [vmem:[%s1 + $0xd0] sm:$0x3]
    %v123 = vld [vmem:[%s1 + $0xd2] sm:$0x3]
    %v124 = vld [vmem:[%s1 + $0xd4] sm:$0x3]
    %v125 = vld [vmem:[%s1 + $0xd6] sm:$0x3]
    %v126 = vld [vmem:[%s1 + $0xd8] sm:$0x3]
    %v127 = vld [vmem:[%s1 + $0xda] sm:$0x3]
    %v128 = vld [vmem:[%s1 + $0xdc] sm:$0x3]
    %v129 = vld [vmem:[%s1 + $0xde] sm:$0x3]
    %v130 = vld [vmem:[%s1 + $0xe0] sm:$0x3]
    %v131 = vld [vmem:[%s1 + $0xe2] sm:$0x3]
    %v132 = vld [vmem:[%s1 + $0xe4] sm:$0x3]
    %v133 = vld [vmem:[%s1 + $0xe6] sm:$0x3]
    %v134 = vld [vmem:[%s1 + $0xe8] sm:$0x3]
    %v135 = vld [vmem:[%s1 + $0xea] sm:$0x3]
    %v136 = vld [vmem:[%s1 + $0xec] sm:$0x3]
    %v137 = vld [vmem:[%s1 + $0xee] sm:$0x3]
    %v138 = vld [vmem:[%s1 + $0xf0] sm:$0x3]
    %v139 = vld [vmem:[%s1 + $0xf2] sm:$0x3]
    %v140 = vld [vmem:[%s1 + $0xf4] sm:$0x3]
    %v141 = vld [vmem:[%s1 + $0xf6] sm:$0x3]
    %v142 = vld [vmem:[%s1 + $0xf8] sm:$0x3]
    %v143 = vld [vmem:[%s1 + $0xfa] sm:$0x3]
    %v144 = vld [vmem:[%s1 + $0xfc] sm:$0x3]
    %v145 = vld [vmem:[%s1 + $0xfe] sm:$0x3]
    %v146 = vld [vmem:[%s2] sm:$0xff]
    %v147 = vld [vmem:[%s2 + $0x8] sm:$0xff]
    %v148 = vld [vmem:[%s2 + $0x10] sm:$0xff]
    %v149 = vld [vmem:[%s2 + $0x18] sm:$0xff]
    %v150 = vld [vmem:[%s0] sm:$0x3]
    %279 = vst [vmem:[#allocation1] ss:$4 sm:$0xff] %v18
    %s280 = scalar_lea.vmem [#allocation1], 1
    %281 = vst [vmem:[%s280] ss:$4 sm:$0xff] %v19
    %s282 = scalar_lea.vmem [#allocation1], 2
    %283 = vst [vmem:[%s282] ss:$4 sm:$0xff] %v20
    %s284 = scalar_lea.vmem [#allocation1], 3
    %285 = vst [vmem:[%s284] ss:$4 sm:$0xff] %v21
    %s286 = scalar_lea.vmem [#allocation1], 32
    %287 = vst [vmem:[%s286] ss:$4 sm:$0xff] %v22
    %s288 = scalar_lea.vmem [#allocation1], 33
    %289 = vst [vmem:[%s288] ss:$4 sm:$0xff] %v23
    %s290 = scalar_lea.vmem [#allocation1], 34
    %291 = vst [vmem:[%s290] ss:$4 sm:$0xff] %v24
    %s292 = scalar_lea.vmem [#allocation1], 35
    %293 = vst [vmem:[%s292] ss:$4 sm:$0xff] %v25
    %v294 = vld.sshfl [vmem:[#allocation1] sm:$0xff pattern:$0x73625140]
    %v295 = vld.sshfl [vmem:[#allocation1 + $0x20] sm:$0xff pattern:$0x73625140]
    %296 = vst [vmem:[#allocation1] ss:$4 sm:$0xff] %v26
    %297 = vst [vmem:[%s280] ss:$4 sm:$0xff] %v27
    %298 = vst [vmem:[%s282] ss:$4 sm:$0xff] %v28
    %299 = vst [vmem:[%s284] ss:$4 sm:$0xff] %v29
    %300 = vst [vmem:[%s286] ss:$4 sm:$0xff] %v30
    %301 = vst [vmem:[%s288] ss:$4 sm:$0xff] %v31
    %302 = vst [vmem:[%s290] ss:$4 sm:$0xff] %v32
    %303 = vst [vmem:[%s292] ss:$4 sm:$0xff] %v33
    %v304 = vld.sshfl [vmem:[#allocation1] sm:$0xff pattern:$0x73625140]
    %v305 = vld.sshfl [vmem:[#allocation1 + $0x20] sm:$0xff pattern:$0x73625140]
    %306 = vst [vmem:[#allocation1] ss:$4 sm:$0xff] %v34
    %307 = vst [vmem:[%s280] ss:$4 sm:$0xff] %v35
    %308 = vst [vmem:[%s282] ss:$4 sm:$0xff] %v36
    %309 = vst [vmem:[%s284] ss:$4 sm:$0xff] %v37
    %310 = vst [vmem:[%s286] ss:$4 sm:$0xff] %v38
    %311 = vst [vmem:[%s288] ss:$4 sm:$0xff] %v39
    %312 = vst [vmem:[%s290] ss:$4 sm:$0xff] %v40
    %313 = vst [vmem:[%s292] ss:$4 sm:$0xff] %v41
    %v314 = vld.sshfl [vmem:[#allocation1] sm:$0xff pattern:$0x73625140]
    %v315 = vld.sshfl [vmem:[#allocation1 + $0x20] sm:$0xff pattern:$0x73625140]
    %316 = vst [vmem:[#allocation1] ss:$4 sm:$0xff] %v42
    %317 = vst [vmem:[%s280] ss:$4 sm:$0xff] %v43
    %318 = vst [vmem:[%s282] ss:$4 sm:$0xff] %v44
    %319 = vst [vmem:[%s284] ss:$4 sm:$0xff] %v45
    %320 = vst [vmem:[%s286] ss:$4 sm:$0xff] %v46
    %321 = vst [vmem:[%s288] ss:$4 sm:$0xff] %v47
    %322 = vst [vmem:[%s290] ss:$4 sm:$0xff] %v48
    %323 = vst [vmem:[%s292] ss:$4 sm:$0xff] %v49
    %v324 = vld.sshfl [vmem:[#allocation1] sm:$0xff pattern:$0x73625140]
    %v325 = vld.sshfl [vmem:[#allocation1 + $0x20] sm:$0xff pattern:$0x73625140]
    %326 = vst [vmem:[#allocation1] ss:$4 sm:$0xff] %v50
    %327 = vst [vmem:[%s280] ss:$4 sm:$0xff] %v51
    %328 = vst [vmem:[%s282] ss:$4 sm:$0xff] %v52
    %329 = vst [vmem:[%s284] ss:$4 sm:$0xff] %v53
    %330 = vst [vmem:[%s286] ss:$4 sm:$0xff] %v54
    %331 = vst [vmem:[%s288] ss:$4 sm:$0xff] %v55
    %332 = vst [vmem:[%s290] ss:$4 sm:$0xff] %v56
    %333 = vst [vmem:[%s292] ss:$4 sm:$0xff] %v57
    %v334 = vld.sshfl [vmem:[#allocation1] sm:$0xff pattern:$0x73625140]
    %v335 = vld.sshfl [vmem:[#allocation1 + $0x20] sm:$0xff pattern:$0x73625140]
    %336 = vst [vmem:[#allocation1] ss:$4 sm:$0xff] %v58
    %337 = vst [vmem:[%s280] ss:$4 sm:$0xff] %v59
    %338 = vst [vmem:[%s282] ss:$4 sm:$0xff] %v60
    %339 = vst [vmem:[%s284] ss:$4 sm:$0xff] %v61
    %340 = vst [vmem:[%s286] ss:$4 sm:$0xff] %v62
    %341 = vst [vmem:[%s288] ss:$4 sm:$0xff] %v63
    %342 = vst [vmem:[%s290] ss:$4 sm:$0xff] %v64
    %343 = vst [vmem:[%s292] ss:$4 sm:$0xff] %v65
    %v344 = vld.sshfl [vmem:[#allocation1] sm:$0xff pattern:$0x73625140]
    %v345 = vld.sshfl [vmem:[#allocation1 + $0x20] sm:$0xff pattern:$0x73625140]
    %346 = vst [vmem:[#allocation1] ss:$4 sm:$0xff] %v66
    %347 = vst [vmem:[%s280] ss:$4 sm:$0xff] %v67
    %348 = vst [vmem:[%s282] ss:$4 sm:$0xff] %v68
    %349 = vst [vmem:[%s284] ss:$4 sm:$0xff] %v69
    %350 = vst [vmem:[%s286] ss:$4 sm:$0xff] %v70
    %351 = vst [vmem:[%s288] ss:$4 sm:$0xff] %v71
    %352 = vst [vmem:[%s290] ss:$4 sm:$0xff] %v72
    %353 = vst [vmem:[%s292] ss:$4 sm:$0xff] %v73
    %v354 = vld.sshfl [vmem:[#allocation1] sm:$0xff pattern:$0x73625140]
    %v355 = vld.sshfl [vmem:[#allocation1 + $0x20] sm:$0xff pattern:$0x73625140]
    %356 = vst [vmem:[#allocation1] ss:$4 sm:$0xff] %v74
    %357 = vst [vmem:[%s280] ss:$4 sm:$0xff] %v75
    %358 = vst [vmem:[%s282] ss:$4 sm:$0xff] %v76
    %359 = vst [vmem:[%s284] ss:$4 sm:$0xff] %v77
    %360 = vst [vmem:[%s286] ss:$4 sm:$0xff] %v78
    %361 = vst [vmem:[%s288] ss:$4 sm:$0xff] %v79
    %362 = vst [vmem:[%s290] ss:$4 sm:$0xff] %v80
    %363 = vst [vmem:[%s292] ss:$4 sm:$0xff] %v81
    %v364 = vld.sshfl [vmem:[#allocation1] sm:$0xff pattern:$0x73625140]
    %v365 = vld.sshfl [vmem:[#allocation1 + $0x20] sm:$0xff pattern:$0x73625140]
    %366 = vst [vmem:[#allocation1] ss:$4 sm:$0xff] %v82
    %367 = vst [vmem:[%s280] ss:$4 sm:$0xff] %v83
    %368 = vst [vmem:[%s282] ss:$4 sm:$0xff] %v84
    %369 = vst [vmem:[%s284] ss:$4 sm:$0xff] %v85
    %370 = vst [vmem:[%s286] ss:$4 sm:$0xff] %v86
    %371 = vst [vmem:[%s288] ss:$4 sm:$0xff] %v87
    %372 = vst [vmem:[%s290] ss:$4 sm:$0xff] %v88
    %373 = vst [vmem:[%s292] ss:$4 sm:$0xff] %v89
    %v374 = vld.sshfl [vmem:[#allocation1] sm:$0xff pattern:$0x73625140]
    %v375 = vld.sshfl [vmem:[#allocation1 + $0x20] sm:$0xff pattern:$0x73625140]
    %376 = vst [vmem:[#allocation1] ss:$4 sm:$0xff] %v90
    %377 = vst [vmem:[%s280] ss:$4 sm:$0xff] %v91
    %378 = vst [vmem:[%s282] ss:$4 sm:$0xff] %v92
    %379 = vst [vmem:[%s284] ss:$4 sm:$0xff] %v93
    %380 = vst [vmem:[%s286] ss:$4 sm:$0xff] %v94
    %381 = vst [vmem:[%s288] ss:$4 sm:$0xff] %v95
    %382 = vst [vmem:[%s290] ss:$4 sm:$0xff] %v96
    %383 = vst [vmem:[%s292] ss:$4 sm:$0xff] %v97
    %v384 = vld.sshfl [vmem:[#allocation1] sm:$0xff pattern:$0x73625140]
    %v385 = vld.sshfl [vmem:[#allocation1 + $0x20] sm:$0xff pattern:$0x73625140]
    %386 = vst [vmem:[#allocation1] ss:$4 sm:$0xff] %v98
    %387 = vst [vmem:[%s280] ss:$4 sm:$0xff] %v99
    %388 = vst [vmem:[%s282] ss:$4 sm:$0xff] %v100
    %389 = vst [vmem:[%s284] ss:$4 sm:$0xff] %v101
    %390 = vst [vmem:[%s286] ss:$4 sm:$0xff] %v102
    %391 = vst [vmem:[%s288] ss:$4 sm:$0xff] %v103
    %392 = vst [vmem:[%s290] ss:$4 sm:$0xff] %v104
    %393 = vst [vmem:[%s292] ss:$4 sm:$0xff] %v105
    %v394 = vld.sshfl [vmem:[#allocation1] sm:$0xff pattern:$0x73625140]
    %v395 = vld.sshfl [vmem:[#allocation1 + $0x20] sm:$0xff pattern:$0x73625140]
    %396 = vst [vmem:[#allocation1] ss:$4 sm:$0xff] %v106
    %397 = vst [vmem:[%s280] ss:$4 sm:$0xff] %v107
    %398 = vst [vmem:[%s282] ss:$4 sm:$0xff] %v108
    %399 = vst [vmem:[%s284] ss:$4 sm:$0xff] %v109
    %400 = vst [vmem:[%s286] ss:$4 sm:$0xff] %v110
    %401 = vst [vmem:[%s288] ss:$4 sm:$0xff] %v111
    %402 = vst [vmem:[%s290] ss:$4 sm:$0xff] %v112
    %403 = vst [vmem:[%s292] ss:$4 sm:$0xff] %v113
    %v404 = vld.sshfl [vmem:[#allocation1] sm:$0xff pattern:$0x73625140]
    %v405 = vld.sshfl [vmem:[#allocation1 + $0x20] sm:$0xff pattern:$0x73625140]
    %406 = vst [vmem:[#allocation1] ss:$4 sm:$0xff] %v114
    %407 = vst [vmem:[%s280] ss:$4 sm:$0xff] %v115
    %408 = vst [vmem:[%s282] ss:$4 sm:$0xff] %v116
    %409 = vst [vmem:[%s284] ss:$4 sm:$0xff] %v117
    %410 = vst [vmem:[%s286] ss:$4 sm:$0xff] %v118
    %411 = vst [vmem:[%s288] ss:$4 sm:$0xff] %v119
    %412 = vst [vmem:[%s290] ss:$4 sm:$0xff] %v120
    %413 = vst [vmem:[%s292] ss:$4 sm:$0xff] %v121
    %v414 = vld.sshfl [vmem:[#allocation1] sm:$0xff pattern:$0x73625140]
    %v415 = vld.sshfl [vmem:[#allocation1 + $0x20] sm:$0xff pattern:$0x73625140]
    %416 = vst [vmem:[#allocation1] ss:$4 sm:$0xff] %v122
    %417 = vst [vmem:[%s280] ss:$4 sm:$0xff] %v123
    %418 = vst [vmem:[%s282] ss:$4 sm:$0xff] %v124
    %419 = vst [vmem:[%s284] ss:$4 sm:$0xff] %v125
    %420 = vst [vmem:[%s286] ss:$4 sm:$0xff] %v126
    %421 = vst [vmem:[%s288] ss:$4 sm:$0xff] %v127
    %422 = vst [vmem:[%s290] ss:$4 sm:$0xff] %v128
    %423 = vst [vmem:[%s292] ss:$4 sm:$0xff] %v129
    %v424 = vld.sshfl [vmem:[#allocation1] sm:$0xff pattern:$0x73625140]
    %v425 = vld.sshfl [vmem:[#allocation1 + $0x20] sm:$0xff pattern:$0x73625140]
    %426 = vst [vmem:[#allocation1] ss:$4 sm:$0xff] %v130
    %427 = vst [vmem:[%s280] ss:$4 sm:$0xff] %v131
    %428 = vst [vmem:[%s282] ss:$4 sm:$0xff] %v132
    %429 = vst [vmem:[%s284] ss:$4 sm:$0xff] %v133
    %430 = vst [vmem:[%s286] ss:$4 sm:$0xff] %v134
    %431 = vst [vmem:[%s288] ss:$4 sm:$0xff] %v135
    %432 = vst [vmem:[%s290] ss:$4 sm:$0xff] %v136
    %433 = vst [vmem:[%s292] ss:$4 sm:$0xff] %v137
    %v434 = vld.sshfl [vmem:[#allocation1] sm:$0xff pattern:$0x73625140]
    %v435 = vld.sshfl [vmem:[#allocation1 + $0x20] sm:$0xff pattern:$0x73625140]
    %436 = vst [vmem:[#allocation1] ss:$4 sm:$0xff] %v138
    %437 = vst [vmem:[%s280] ss:$4 sm:$0xff] %v139
    %438 = vst [vmem:[%s282] ss:$4 sm:$0xff] %v140
    %439 = vst [vmem:[%s284] ss:$4 sm:$0xff] %v141
    %440 = vst [vmem:[%s286] ss:$4 sm:$0xff] %v142
    %441 = vst [vmem:[%s288] ss:$4 sm:$0xff] %v143
    %442 = vst [vmem:[%s290] ss:$4 sm:$0xff] %v144
    %443 = vst [vmem:[%s292] ss:$4 sm:$0xff] %v145
    %v444 = vld.sshfl [vmem:[#allocation1] sm:$0xff pattern:$0x73625140]
    %v445 = vld.sshfl [vmem:[#allocation1 + $0x20] sm:$0xff pattern:$0x73625140]
    %447 = vst [vmem:[#allocation1] ss:$4 sm:$0xff] %v150
    %s448 = scalar_lea.vmem [#allocation1], 1
    %449 = vst [vmem:[%s448] ss:$4 sm:$0xff] %v150
    %s450 = scalar_lea.vmem [#allocation1], 2
    %451 = vst [vmem:[%s450] ss:$4 sm:$0xff] %v150
    %s452 = scalar_lea.vmem [#allocation1], 3
    %453 = vst [vmem:[%s452] ss:$4 sm:$0xff] %v150
    %s454 = scalar_lea.vmem [#allocation1], 32
    %455 = vst [vmem:[%s454] ss:$4 sm:$0xff] %v150
    %s456 = scalar_lea.vmem [#allocation1], 33
    %457 = vst [vmem:[%s456] ss:$4 sm:$0xff] %v150
    %s458 = scalar_lea.vmem [#allocation1], 34
    %459 = vst [vmem:[%s458] ss:$4 sm:$0xff] %v150
    %s460 = scalar_lea.vmem [#allocation1], 35
    %461 = vst [vmem:[%s460] ss:$4 sm:$0xff] %v150
    %v462 = vld.sshfl [vmem:[#allocation1] sm:$0xff pattern:$0x73625140]
    %v463 = vld.sshfl [vmem:[#allocation1 + $0x20] sm:$0xff pattern:$0x73625140]
    %464 = vst [vmem:[#allocation1] ss:$4 sm:$0xff] %v150
    %465 = vst [vmem:[%s448] ss:$4 sm:$0xff] %v150
    %466 = vst [vmem:[%s450] ss:$4 sm:$0xff] %v150
    %467 = vst [vmem:[%s452] ss:$4 sm:$0xff] %v150
    %468 = vst [vmem:[%s454] ss:$4 sm:$0xff] %v150
    %469 = vst [vmem:[%s456] ss:$4 sm:$0xff] %v150
    %470 = vst [vmem:[%s458] ss:$4 sm:$0xff] %v150
    %471 = vst [vmem:[%s460] ss:$4 sm:$0xff] %v150
    %v472 = vld.sshfl [vmem:[#allocation1] sm:$0xff pattern:$0x73625140]
    %v473 = vld.sshfl [vmem:[#allocation1 + $0x20] sm:$0xff pattern:$0x73625140]
    %474 = vst [vmem:[#allocation1] ss:$4 sm:$0xff] %v150
    %475 = vst [vmem:[%s448] ss:$4 sm:$0xff] %v150
    %476 = vst [vmem:[%s450] ss:$4 sm:$0xff] %v150
    %477 = vst [vmem:[%s452] ss:$4 sm:$0xff] %v150
    %478 = vst [vmem:[%s454] ss:$4 sm:$0xff] %v150
    %479 = vst [vmem:[%s456] ss:$4 sm:$0xff] %v150
    %480 = vst [vmem:[%s458] ss:$4 sm:$0xff] %v150
    %481 = vst [vmem:[%s460] ss:$4 sm:$0xff] %v150
    %v482 = vld.sshfl [vmem:[#allocation1] sm:$0xff pattern:$0x73625140]
    %v483 = vld.sshfl [vmem:[#allocation1 + $0x20] sm:$0xff pattern:$0x73625140]
    %484 = vst [vmem:[#allocation1] ss:$4 sm:$0xff] %v150
    %485 = vst [vmem:[%s448] ss:$4 sm:$0xff] %v150
    %486 = vst [vmem:[%s450] ss:$4 sm:$0xff] %v150
    %487 = vst [vmem:[%s452] ss:$4 sm:$0xff] %v150
    %488 = vst [vmem:[%s454] ss:$4 sm:$0xff] %v150
    %489 = vst [vmem:[%s456] ss:$4 sm:$0xff] %v150
    %490 = vst [vmem:[%s458] ss:$4 sm:$0xff] %v150
    %491 = vst [vmem:[%s460] ss:$4 sm:$0xff] %v150
    %v492 = vld.sshfl [vmem:[#allocation1] sm:$0xff pattern:$0x73625140]
    %v493 = vld.sshfl [vmem:[#allocation1 + $0x20] sm:$0xff pattern:$0x73625140]
    %494 = vst [vmem:[#allocation1] ss:$4 sm:$0xff] %v150
    %495 = vst [vmem:[%s448] ss:$4 sm:$0xff] %v150
    %496 = vst [vmem:[%s450] ss:$4 sm:$0xff] %v150
    %497 = vst [vmem:[%s452] ss:$4 sm:$0xff] %v150
    %498 = vst [vmem:[%s454] ss:$4 sm:$0xff] %v150
    %499 = vst [vmem:[%s456] ss:$4 sm:$0xff] %v150
    %500 = vst [vmem:[%s458] ss:$4 sm:$0xff] %v150
    %501 = vst [vmem:[%s460] ss:$4 sm:$0xff] %v150
    %v502 = vld.sshfl [vmem:[#allocation1] sm:$0xff pattern:$0x73625140]
    %v503 = vld.sshfl [vmem:[#allocation1 + $0x20] sm:$0xff pattern:$0x73625140]
    %504 = vst [vmem:[#allocation1] ss:$4 sm:$0xff] %v150
    %505 = vst [vmem:[%s448] ss:$4 sm:$0xff] %v150
    %506 = vst [vmem:[%s450] ss:$4 sm:$0xff] %v150
    %507 = vst [vmem:[%s452] ss:$4 sm:$0xff] %v150
    %508 = vst [vmem:[%s454] ss:$4 sm:$0xff] %v150
    %509 = vst [vmem:[%s456] ss:$4 sm:$0xff] %v150
    %510 = vst [vmem:[%s458] ss:$4 sm:$0xff] %v150
    %511 = vst [vmem:[%s460] ss:$4 sm:$0xff] %v150
    %v512 = vld.sshfl [vmem:[#allocation1] sm:$0xff pattern:$0x73625140]
    %v513 = vld.sshfl [vmem:[#allocation1 + $0x20] sm:$0xff pattern:$0x73625140]
    %514 = vst [vmem:[#allocation1] ss:$4 sm:$0xff] %v150
    %515 = vst [vmem:[%s448] ss:$4 sm:$0xff] %v150
    %516 = vst [vmem:[%s450] ss:$4 sm:$0xff] %v150
    %517 = vst [vmem:[%s452] ss:$4 sm:$0xff] %v150
    %518 = vst [vmem:[%s454] ss:$4 sm:$0xff] %v150
    %519 = vst [vmem:[%s456] ss:$4 sm:$0xff] %v150
    %520 = vst [vmem:[%s458] ss:$4 sm:$0xff] %v150
    %521 = vst [vmem:[%s460] ss:$4 sm:$0xff] %v150
    %v522 = vld.sshfl [vmem:[#allocation1] sm:$0xff pattern:$0x73625140]
    %v523 = vld.sshfl [vmem:[#allocation1 + $0x20] sm:$0xff pattern:$0x73625140]
    %524 = vst [vmem:[#allocation1] ss:$4 sm:$0xff] %v150
    %525 = vst [vmem:[%s448] ss:$4 sm:$0xff] %v150
    %526 = vst [vmem:[%s450] ss:$4 sm:$0xff] %v150
    %527 = vst [vmem:[%s452] ss:$4 sm:$0xff] %v150
    %528 = vst [vmem:[%s454] ss:$4 sm:$0xff] %v150
    %529 = vst [vmem:[%s456] ss:$4 sm:$0xff] %v150
    %530 = vst [vmem:[%s458] ss:$4 sm:$0xff] %v150
    %531 = vst [vmem:[%s460] ss:$4 sm:$0xff] %v150
    %v532 = vld.sshfl [vmem:[#allocation1] sm:$0xff pattern:$0x73625140]
    %v533 = vld.sshfl [vmem:[#allocation1 + $0x20] sm:$0xff pattern:$0x73625140]
    %534 = vst [vmem:[#allocation1] ss:$4 sm:$0xff] %v150
    %535 = vst [vmem:[%s448] ss:$4 sm:$0xff] %v150
    %536 = vst [vmem:[%s450] ss:$4 sm:$0xff] %v150
    %537 = vst [vmem:[%s452] ss:$4 sm:$0xff] %v150
    %538 = vst [vmem:[%s454] ss:$4 sm:$0xff] %v150
    %539 = vst [vmem:[%s456] ss:$4 sm:$0xff] %v150
    %540 = vst [vmem:[%s458] ss:$4 sm:$0xff] %v150
    %541 = vst [vmem:[%s460] ss:$4 sm:$0xff] %v150
    %v542 = vld.sshfl [vmem:[#allocation1] sm:$0xff pattern:$0x73625140]
    %v543 = vld.sshfl [vmem:[#allocation1 + $0x20] sm:$0xff pattern:$0x73625140]
    %544 = vst [vmem:[#allocation1] ss:$4 sm:$0xff] %v150
    %545 = vst [vmem:[%s448] ss:$4 sm:$0xff] %v150
    %546 = vst [vmem:[%s450] ss:$4 sm:$0xff] %v150
    %547 = vst [vmem:[%s452] ss:$4 sm:$0xff] %v150
    %548 = vst [vmem:[%s454] ss:$4 sm:$0xff] %v150
    %549 = vst [vmem:[%s456] ss:$4 sm:$0xff] %v150
    %550 = vst [vmem:[%s458] ss:$4 sm:$0xff] %v150
    %551 = vst [vmem:[%s460] ss:$4 sm:$0xff] %v150
    %v552 = vld.sshfl [vmem:[#allocation1] sm:$0xff pattern:$0x73625140]
    %v553 = vld.sshfl [vmem:[#allocation1 + $0x20] sm:$0xff pattern:$0x73625140]
    %554 = vst [vmem:[#allocation1] ss:$4 sm:$0xff] %v150
    %555 = vst [vmem:[%s448] ss:$4 sm:$0xff] %v150
    %556 = vst [vmem:[%s450] ss:$4 sm:$0xff] %v150
    %557 = vst [vmem:[%s452] ss:$4 sm:$0xff] %v150
    %558 = vst [vmem:[%s454] ss:$4 sm:$0xff] %v150
    %559 = vst [vmem:[%s456] ss:$4 sm:$0xff] %v150
    %560 = vst [vmem:[%s458] ss:$4 sm:$0xff] %v150
    %561 = vst [vmem:[%s460] ss:$4 sm:$0xff] %v150
    %v562 = vld.sshfl [vmem:[#allocation1] sm:$0xff pattern:$0x73625140]
    %v563 = vld.sshfl [vmem:[#allocation1 + $0x20] sm:$0xff pattern:$0x73625140]
    %564 = vst [vmem:[#allocation1] ss:$4 sm:$0xff] %v150
    %565 = vst [vmem:[%s448] ss:$4 sm:$0xff] %v150
    %566 = vst [vmem:[%s450] ss:$4 sm:$0xff] %v150
    %567 = vst [vmem:[%s452] ss:$4 sm:$0xff] %v150
    %568 = vst [vmem:[%s454] ss:$4 sm:$0xff] %v150
    %569 = vst [vmem:[%s456] ss:$4 sm:$0xff] %v150
    %570 = vst [vmem:[%s458] ss:$4 sm:$0xff] %v150
    %571 = vst [vmem:[%s460] ss:$4 sm:$0xff] %v150
    %v572 = vld.sshfl [vmem:[#allocation1] sm:$0xff pattern:$0x73625140]
    %v573 = vld.sshfl [vmem:[#allocation1 + $0x20] sm:$0xff pattern:$0x73625140]
    %574 = vst [vmem:[#allocation1] ss:$4 sm:$0xff] %v150
    %575 = vst [vmem:[%s448] ss:$4 sm:$0xff] %v150
    %576 = vst [vmem:[%s450] ss:$4 sm:$0xff] %v150
    %577 = vst [vmem:[%s452] ss:$4 sm:$0xff] %v150
    %578 = vst [vmem:[%s454] ss:$4 sm:$0xff] %v150
    %579 = vst [vmem:[%s456] ss:$4 sm:$0xff] %v150
    %580 = vst [vmem:[%s458] ss:$4 sm:$0xff] %v150
    %581 = vst [vmem:[%s460] ss:$4 sm:$0xff] %v150
    %v582 = vld.sshfl [vmem:[#allocation1] sm:$0xff pattern:$0x73625140]
    %v583 = vld.sshfl [vmem:[#allocation1 + $0x20] sm:$0xff pattern:$0x73625140]
    %584 = vst [vmem:[#allocation1] ss:$4 sm:$0xff] %v150
    %585 = vst [vmem:[%s448] ss:$4 sm:$0xff] %v150
    %586 = vst [vmem:[%s450] ss:$4 sm:$0xff] %v150
    %587 = vst [vmem:[%s452] ss:$4 sm:$0xff] %v150
    %588 = vst [vmem:[%s454] ss:$4 sm:$0xff] %v150
    %589 = vst [vmem:[%s456] ss:$4 sm:$0xff] %v150
    %590 = vst [vmem:[%s458] ss:$4 sm:$0xff] %v150
    %591 = vst [vmem:[%s460] ss:$4 sm:$0xff] %v150
    %v592 = vld.sshfl [vmem:[#allocation1] sm:$0xff pattern:$0x73625140]
    %v593 = vld.sshfl [vmem:[#allocation1 + $0x20] sm:$0xff pattern:$0x73625140]
    %594 = vst [vmem:[#allocation1] ss:$4 sm:$0xff] %v150
    %595 = vst [vmem:[%s448] ss:$4 sm:$0xff] %v150
    %596 = vst [vmem:[%s450] ss:$4 sm:$0xff] %v150
    %597 = vst [vmem:[%s452] ss:$4 sm:$0xff] %v150
    %598 = vst [vmem:[%s454] ss:$4 sm:$0xff] %v150
    %599 = vst [vmem:[%s456] ss:$4 sm:$0xff] %v150
    %600 = vst [vmem:[%s458] ss:$4 sm:$0xff] %v150
    %601 = vst [vmem:[%s460] ss:$4 sm:$0xff] %v150
    %v602 = vld.sshfl [vmem:[#allocation1] sm:$0xff pattern:$0x73625140]
    %v603 = vld.sshfl [vmem:[#allocation1 + $0x20] sm:$0xff pattern:$0x73625140]
    %604 = vst [vmem:[#allocation1] ss:$4 sm:$0xff] %v150
    %605 = vst [vmem:[%s448] ss:$4 sm:$0xff] %v150
    %606 = vst [vmem:[%s450] ss:$4 sm:$0xff] %v150
    %607 = vst [vmem:[%s452] ss:$4 sm:$0xff] %v150
    %608 = vst [vmem:[%s454] ss:$4 sm:$0xff] %v150
    %609 = vst [vmem:[%s456] ss:$4 sm:$0xff] %v150
    %610 = vst [vmem:[%s458] ss:$4 sm:$0xff] %v150
    %611 = vst [vmem:[%s460] ss:$4 sm:$0xff] %v150
    %v612 = vld.sshfl [vmem:[#allocation1] sm:$0xff pattern:$0x73625140]
    %v613 = vld.sshfl [vmem:[#allocation1 + $0x20] sm:$0xff pattern:$0x73625140]
    %vm646 = vcmask 261120
    %v647 = vsel %vm646, %v294, 0
    %v649 = vsel %vm646, %v295, 0
    %v651 = vsel %vm646, %v304, 0
    %v653 = vsel %vm646, %v305, 0
    %v655 = vsel %vm646, %v314, 0
    %v657 = vsel %vm646, %v315, 0
    %v659 = vsel %vm646, %v324, 0
    %v661 = vsel %vm646, %v325, 0
    %v663 = vsel %vm646, %v334, 0
    %v665 = vsel %vm646, %v335, 0
    %v667 = vsel %vm646, %v344, 0
    %v669 = vsel %vm646, %v345, 0
    %v671 = vsel %vm646, %v354, 0
    %v673 = vsel %vm646, %v355, 0
    %v675 = vsel %vm646, %v364, 0
    %v677 = vsel %vm646, %v365, 0
    %v679 = vsel %vm646, %v374, 0
    %v681 = vsel %vm646, %v375, 0
    %v683 = vsel %vm646, %v384, 0
    %v685 = vsel %vm646, %v385, 0
    %v687 = vsel %vm646, %v394, 0
    %v689 = vsel %vm646, %v395, 0
    %v691 = vsel %vm646, %v404, 0
    %v693 = vsel %vm646, %v405, 0
    %v695 = vsel %vm646, %v414, 0
    %v697 = vsel %vm646, %v415, 0
    %v699 = vsel %vm646, %v424, 0
    %v701 = vsel %vm646, %v425, 0
    %v703 = vsel %vm646, %v434, 0
    %v705 = vsel %vm646, %v435, 0
    %v707 = vsel %vm646, %v444, 0
    %v709 = vsel %vm646, %v445, 0
    %711 = vmatpush.msra.mxu0 0.0
    %712 = vmatpush.msra.mxu0 0.0
    %713 = vmatpush.msra.mxu0 0.0
    %714 = vmatpush.msra.mxu0 0.0
    %715 = vmatpush.msra.mxu0 0.0
    %716 = vmatpush.msra.mxu0 0.0
    %717 = vmatpush.msra.mxu0 0.0
    %718 = vmatpush.msra.mxu0 0.0
    %719 = vmatpush.msra.mxu0 0.0
    %720 = vmatpush.msra.mxu0 0.0
    %721 = vmatpush.msra.mxu0 0.0
    %722 = vmatpush.msra.mxu0 0.0
    %723 = vmatpush.msra.mxu0 %v149
    %724 = vmatpush.msra.mxu0 %v148
    %725 = vmatpush.msra.mxu0 %v147
    %726 = vmatpush.msra.mxu0 %v146
    %727 = vmatmul.f32.gmra.mxu0 %v647
    %v728 = vpop.f32.mrf.mxu0
    %v729 = vadd.f32 %v462, %v728
    %730 = vmatmul.f32.gmra.mxu0 %v649
    %v731 = vpop.f32.mrf.mxu0
    %v732 = vadd.f32 %v463, %v731
    %733 = vmatmul.f32.gmra.mxu0 %v651
    %v734 = vpop.f32.mrf.mxu0
    %v735 = vadd.f32 %v472, %v734
    %736 = vmatmul.f32.gmra.mxu0 %v653
    %v737 = vpop.f32.mrf.mxu0
    %v738 = vadd.f32 %v473, %v737
    %739 = vmatmul.f32.gmra.mxu0 %v655
    %v740 = vpop.f32.mrf.mxu0
    %v741 = vadd.f32 %v482, %v740
    %742 = vmatmul.f32.gmra.mxu0 %v657
    %v743 = vpop.f32.mrf.mxu0
    %v744 = vadd.f32 %v483, %v743
    %745 = vmatmul.f32.gmra.mxu0 %v659
    %v746 = vpop.f32.mrf.mxu0
    %v747 = vadd.f32 %v492, %v746
    %748 = vmatmul.f32.gmra.mxu0 %v661
    %v749 = vpop.f32.mrf.mxu0
    %v750 = vadd.f32 %v493, %v749
    %751 = vmatmul.f32.gmra.mxu0 %v663
    %v752 = vpop.f32.mrf.mxu0
    %v753 = vadd.f32 %v502, %v752
    %754 = vmatmul.f32.gmra.mxu0 %v665
    %v755 = vpop.f32.mrf.mxu0
    %v756 = vadd.f32 %v503, %v755
    %757 = vmatmul.f32.gmra.mxu0 %v667
    %v758 = vpop.f32.mrf.mxu0
    %v759 = vadd.f32 %v512, %v758
    %760 = vmatmul.f32.gmra.mxu0 %v669
    %v761 = vpop.f32.mrf.mxu0
    %v762 = vadd.f32 %v513, %v761
    %763 = vmatmul.f32.gmra.mxu0 %v671
    %v764 = vpop.f32.mrf.mxu0
    %v765 = vadd.f32 %v522, %v764
    %766 = vmatmul.f32.gmra.mxu0 %v673
    %v767 = vpop.f32.mrf.mxu0
    %v768 = vadd.f32 %v523, %v767
    %769 = vmatmul.f32.gmra.mxu0 %v675
    %v770 = vpop.f32.mrf.mxu0
    %v771 = vadd.f32 %v532, %v770
    %772 = vmatmul.f32.gmra.mxu0 %v677
    %v773 = vpop.f32.mrf.mxu0
    %v774 = vadd.f32 %v533, %v773
    %775 = vmatmul.f32.gmra.mxu0 %v679
    %v776 = vpop.f32.mrf.mxu0
    %v777 = vadd.f32 %v542, %v776
    %778 = vmatmul.f32.gmra.mxu0 %v681
    %v779 = vpop.f32.mrf.mxu0
    %v780 = vadd.f32 %v543, %v779
    %781 = vmatmul.f32.gmra.mxu0 %v683
    %v782 = vpop.f32.mrf.mxu0
    %v783 = vadd.f32 %v552, %v782
    %784 = vmatmul.f32.gmra.mxu0 %v685
    %v785 = vpop.f32.mrf.mxu0
    %v786 = vadd.f32 %v553, %v785
    %787 = vmatmul.f32.gmra.mxu0 %v687
    %v788 = vpop.f32.mrf.mxu0
    %v789 = vadd.f32 %v562, %v788
    %790 = vmatmul.f32.gmra.mxu0 %v689
    %v791 = vpop.f32.mrf.mxu0
    %v792 = vadd.f32 %v563, %v791
    %793 = vmatmul.f32.gmra.mxu0 %v691
    %v794 = vpop.f32.mrf.mxu0
    %v795 = vadd.f32 %v572, %v794
    %796 = vmatmul.f32.gmra.mxu0 %v693
    %v797 = vpop.f32.mrf.mxu0
    %v798 = vadd.f32 %v573, %v797
    %799 = vmatmul.f32.gmra.mxu0 %v695
    %v800 = vpop.f32.mrf.mxu0
    %v801 = vadd.f32 %v582, %v800
    %802 = vmatmul.f32.gmra.mxu0 %v697
    %v803 = vpop.f32.mrf.mxu0
    %v804 = vadd.f32 %v583, %v803
    %805 = vmatmul.f32.gmra.mxu0 %v699
    %v806 = vpop.f32.mrf.mxu0
    %v807 = vadd.f32 %v592, %v806
    %808 = vmatmul.f32.gmra.mxu0 %v701
    %v809 = vpop.f32.mrf.mxu0
    %v810 = vadd.f32 %v593, %v809
    %811 = vmatmul.f32.gmra.mxu0 %v703
    %v812 = vpop.f32.mrf.mxu0
    %v813 = vadd.f32 %v602, %v812
    %814 = vmatmul.f32.gmra.mxu0 %v705
    %v815 = vpop.f32.mrf.mxu0
    %v816 = vadd.f32 %v603, %v815
    %817 = vmatmul.f32.gmra.mxu0 %v707
    %v818 = vpop.f32.mrf.mxu0
    %v819 = vadd.f32 %v612, %v818
    %820 = vmatmul.f32.gmra.mxu0 %v709
    %v821 = vpop.f32.mrf.mxu0
    %v822 = vadd.f32 %v613, %v821
    %823 = vdwg.mxu0
    %v856 = vrot.slane %v729, 2
    %v857 = vrot.slane %v729, 4
    %v858 = vrot.slane %v729, 6
    %v859 = vrot.slane %v732, 2
    %v860 = vrot.slane %v732, 4
    %v861 = vrot.slane %v732, 6
    %v862 = vrot.slane %v735, 2
    %v863 = vrot.slane %v735, 4
    %v864 = vrot.slane %v735, 6
    %v865 = vrot.slane %v738, 2
    %v866 = vrot.slane %v738, 4
    %v867 = vrot.slane %v738, 6
    %v868 = vrot.slane %v741, 2
    %v869 = vrot.slane %v741, 4
    %v870 = vrot.slane %v741, 6
    %v871 = vrot.slane %v744, 2
    %v872 = vrot.slane %v744, 4
    %v873 = vrot.slane %v744, 6
    %v874 = vrot.slane %v747, 2
    %v875 = vrot.slane %v747, 4
    %v876 = vrot.slane %v747, 6
    %v877 = vrot.slane %v750, 2
    %v878 = vrot.slane %v750, 4
    %v879 = vrot.slane %v750, 6
    %v880 = vrot.slane %v753, 2
    %v881 = vrot.slane %v753, 4
    %v882 = vrot.slane %v753, 6
    %v883 = vrot.slane %v756, 2
    %v884 = vrot.slane %v756, 4
    %v885 = vrot.slane %v756, 6
    %v886 = vrot.slane %v759, 2
    %v887 = vrot.slane %v759, 4
    %v888 = vrot.slane %v759, 6
    %v889 = vrot.slane %v762, 2
    %v890 = vrot.slane %v762, 4
    %v891 = vrot.slane %v762, 6
    %v892 = vrot.slane %v765, 2
    %v893 = vrot.slane %v765, 4
    %v894 = vrot.slane %v765, 6
    %v895 = vrot.slane %v768, 2
    %v896 = vrot.slane %v768, 4
    %v897 = vrot.slane %v768, 6
    %v898 = vrot.slane %v771, 2
    %v899 = vrot.slane %v771, 4
    %v900 = vrot.slane %v771, 6
    %v901 = vrot.slane %v774, 2
    %v902 = vrot.slane %v774, 4
    %v903 = vrot.slane %v774, 6
    %v904 = vrot.slane %v777, 2
    %v905 = vrot.slane %v777, 4
    %v906 = vrot.slane %v777, 6
    %v907 = vrot.slane %v780, 2
    %v908 = vrot.slane %v780, 4
    %v909 = vrot.slane %v780, 6
    %v910 = vrot.slane %v783, 2
    %v911 = vrot.slane %v783, 4
    %v912 = vrot.slane %v783, 6
    %v913 = vrot.slane %v786, 2
    %v914 = vrot.slane %v786, 4
    %v915 = vrot.slane %v786, 6
    %v916 = vrot.slane %v789, 2
    %v917 = vrot.slane %v789, 4
    %v918 = vrot.slane %v789, 6
    %v919 = vrot.slane %v792, 2
    %v920 = vrot.slane %v792, 4
    %v921 = vrot.slane %v792, 6
    %v922 = vrot.slane %v795, 2
    %v923 = vrot.slane %v795, 4
    %v924 = vrot.slane %v795, 6
    %v925 = vrot.slane %v798, 2
    %v926 = vrot.slane %v798, 4
    %v927 = vrot.slane %v798, 6
    %v928 = vrot.slane %v801, 2
    %v929 = vrot.slane %v801, 4
    %v930 = vrot.slane %v801, 6
    %v931 = vrot.slane %v804, 2
    %v932 = vrot.slane %v804, 4
    %v933 = vrot.slane %v804, 6
    %v934 = vrot.slane %v807, 2
    %v935 = vrot.slane %v807, 4
    %v936 = vrot.slane %v807, 6
    %v937 = vrot.slane %v810, 2
    %v938 = vrot.slane %v810, 4
    %v939 = vrot.slane %v810, 6
    %v940 = vrot.slane %v813, 2
    %v941 = vrot.slane %v813, 4
    %v942 = vrot.slane %v813, 6
    %v943 = vrot.slane %v816, 2
    %v944 = vrot.slane %v816, 4
    %v945 = vrot.slane %v816, 6
    %v946 = vrot.slane %v819, 2
    %v947 = vrot.slane %v819, 4
    %v948 = vrot.slane %v819, 6
    %v949 = vrot.slane %v822, 2
    %v950 = vrot.slane %v822, 4
    %v951 = vrot.slane %v822, 6
    %v1048 = vtanh.pop %v729
    %v1049 = vtanh.pop %v856
    %v1050 = vtanh.pop %v857
    %v1051 = vtanh.pop %v858
    %v1052 = vtanh.pop %v732
    %v1053 = vtanh.pop %v859
    %v1054 = vtanh.pop %v860
    %v1055 = vtanh.pop %v861
    %v1056 = vtanh.pop %v735
    %v1057 = vtanh.pop %v862
    %v1058 = vtanh.pop %v863
    %v1059 = vtanh.pop %v864
    %v1060 = vtanh.pop %v738
    %v1061 = vtanh.pop %v865
    %v1062 = vtanh.pop %v866
    %v1063 = vtanh.pop %v867
    %v1064 = vtanh.pop %v741
    %v1065 = vtanh.pop %v868
    %v1066 = vtanh.pop %v869
    %v1067 = vtanh.pop %v870
    %v1068 = vtanh.pop %v744
    %v1069 = vtanh.pop %v871
    %v1070 = vtanh.pop %v872
    %v1071 = vtanh.pop %v873
    %v1072 = vtanh.pop %v747
    %v1073 = vtanh.pop %v874
    %v1074 = vtanh.pop %v875
    %v1075 = vtanh.pop %v876
    %v1076 = vtanh.pop %v750
    %v1077 = vtanh.pop %v877
    %v1078 = vtanh.pop %v878
    %v1079 = vtanh.pop %v879
    %v1080 = vtanh.pop %v753
    %v1081 = vtanh.pop %v880
    %v1082 = vtanh.pop %v881
    %v1083 = vtanh.pop %v882
    %v1084 = vtanh.pop %v756
    %v1085 = vtanh.pop %v883
    %v1086 = vtanh.pop %v884
    %v1087 = vtanh.pop %v885
    %v1088 = vtanh.pop %v759
    %v1089 = vtanh.pop %v886
    %v1090 = vtanh.pop %v887
    %v1091 = vtanh.pop %v888
    %v1092 = vtanh.pop %v762
    %v1093 = vtanh.pop %v889
    %v1094 = vtanh.pop %v890
    %v1095 = vtanh.pop %v891
    %v1096 = vtanh.pop %v765
    %v1097 = vtanh.pop %v892
    %v1098 = vtanh.pop %v893
    %v1099 = vtanh.pop %v894
    %v1100 = vtanh.pop %v768
    %v1101 = vtanh.pop %v895
    %v1102 = vtanh.pop %v896
    %v1103 = vtanh.pop %v897
    %v1104 = vtanh.pop %v771
    %v1105 = vtanh.pop %v898
    %v1106 = vtanh.pop %v899
    %v1107 = vtanh.pop %v900
    %v1108 = vtanh.pop %v774
    %v1109 = vtanh.pop %v901
    %v1110 = vtanh.pop %v902
    %v1111 = vtanh.pop %v903
    %v1112 = vtanh.pop %v777
    %v1113 = vtanh.pop %v904
    %v1114 = vtanh.pop %v905
    %v1115 = vtanh.pop %v906
    %v1116 = vtanh.pop %v780
    %v1117 = vtanh.pop %v907
    %v1118 = vtanh.pop %v908
    %v1119 = vtanh.pop %v909
    %v1120 = vtanh.pop %v783
    %v1121 = vtanh.pop %v910
    %v1122 = vtanh.pop %v911
    %v1123 = vtanh.pop %v912
    %v1124 = vtanh.pop %v786
    %v1125 = vtanh.pop %v913
    %v1126 = vtanh.pop %v914
    %v1127 = vtanh.pop %v915
    %v1128 = vtanh.pop %v789
    %v1129 = vtanh.pop %v916
    %v1130 = vtanh.pop %v917
    %v1131 = vtanh.pop %v918
    %v1132 = vtanh.pop %v792
    %v1133 = vtanh.pop %v919
    %v1134 = vtanh.pop %v920
    %v1135 = vtanh.pop %v921
    %v1136 = vtanh.pop %v795
    %v1137 = vtanh.pop %v922
    %v1138 = vtanh.pop %v923
    %v1139 = vtanh.pop %v924
    %v1140 = vtanh.pop %v798
    %v1141 = vtanh.pop %v925
    %v1142 = vtanh.pop %v926
    %v1143 = vtanh.pop %v927
    %v1144 = vtanh.pop %v801
    %v1145 = vtanh.pop %v928
    %v1146 = vtanh.pop %v929
    %v1147 = vtanh.pop %v930
    %v1148 = vtanh.pop %v804
    %v1149 = vtanh.pop %v931
    %v1150 = vtanh.pop %v932
    %v1151 = vtanh.pop %v933
    %v1152 = vtanh.pop %v807
    %v1153 = vtanh.pop %v934
    %v1154 = vtanh.pop %v935
    %v1155 = vtanh.pop %v936
    %v1156 = vtanh.pop %v810
    %v1157 = vtanh.pop %v937
    %v1158 = vtanh.pop %v938
    %v1159 = vtanh.pop %v939
    %v1160 = vtanh.pop %v813
    %v1161 = vtanh.pop %v940
    %v1162 = vtanh.pop %v941
    %v1163 = vtanh.pop %v942
    %v1164 = vtanh.pop %v816
    %v1165 = vtanh.pop %v943
    %v1166 = vtanh.pop %v944
    %v1167 = vtanh.pop %v945
    %v1168 = vtanh.pop %v819
    %v1169 = vtanh.pop %v946
    %v1170 = vtanh.pop %v947
    %v1171 = vtanh.pop %v948
    %v1172 = vtanh.pop %v822
    %v1173 = vtanh.pop %v949
    %v1174 = vtanh.pop %v950
    %v1175 = vtanh.pop %v951
    %v1176 = vld [vmem:[%s3] sm:$0x1]
    %v1178 = vperm.slane %v1176, 0
    %v1180 = vmul.f32 %v1048, %v1178
    %v1181 = vmul.f32 %v1049, %v1178
    %v1182 = vmul.f32 %v1050, %v1178
    %v1183 = vmul.f32 %v1051, %v1178
    %v1184 = vmul.f32 %v1052, %v1178
    %v1185 = vmul.f32 %v1053, %v1178
    %v1186 = vmul.f32 %v1054, %v1178
    %v1187 = vmul.f32 %v1055, %v1178
    %v1188 = vmul.f32 %v1056, %v1178
    %v1189 = vmul.f32 %v1057, %v1178
    %v1190 = vmul.f32 %v1058, %v1178
    %v1191 = vmul.f32 %v1059, %v1178
    %v1192 = vmul.f32 %v1060, %v1178
    %v1193 = vmul.f32 %v1061, %v1178
    %v1194 = vmul.f32 %v1062, %v1178
    %v1195 = vmul.f32 %v1063, %v1178
    %v1196 = vmul.f32 %v1064, %v1178
    %v1197 = vmul.f32 %v1065, %v1178
    %v1198 = vmul.f32 %v1066, %v1178
    %v1199 = vmul.f32 %v1067, %v1178
    %v1200 = vmul.f32 %v1068, %v1178
    %v1201 = vmul.f32 %v1069, %v1178
    %v1202 = vmul.f32 %v1070, %v1178
    %v1203 = vmul.f32 %v1071, %v1178
    %v1204 = vmul.f32 %v1072, %v1178
    %v1205 = vmul.f32 %v1073, %v1178
    %v1206 = vmul.f32 %v1074, %v1178
    %v1207 = vmul.f32 %v1075, %v1178
    %v1208 = vmul.f32 %v1076, %v1178
    %v1209 = vmul.f32 %v1077, %v1178
    %v1210 = vmul.f32 %v1078, %v1178
    %v1211 = vmul.f32 %v1079, %v1178
    %v1212 = vmul.f32 %v1080, %v1178
    %v1213 = vmul.f32 %v1081, %v1178
    %v1214 = vmul.f32 %v1082, %v1178
    %v1215 = vmul.f32 %v1083, %v1178
    %v1216 = vmul.f32 %v1084, %v1178
    %v1217 = vmul.f32 %v1085, %v1178
    %v1218 = vmul.f32 %v1086, %v1178
    %v1219 = vmul.f32 %v1087, %v1178
    %v1220 = vmul.f32 %v1088, %v1178
    %v1221 = vmul.f32 %v1089, %v1178
    %v1222 = vmul.f32 %v1090, %v1178
    %v1223 = vmul.f32 %v1091, %v1178
    %v1224 = vmul.f32 %v1092, %v1178
    %v1225 = vmul.f32 %v1093, %v1178
    %v1226 = vmul.f32 %v1094, %v1178
    %v1227 = vmul.f32 %v1095, %v1178
    %v1228 = vmul.f32 %v1096, %v1178
    %v1229 = vmul.f32 %v1097, %v1178
    %v1230 = vmul.f32 %v1098, %v1178
    %v1231 = vmul.f32 %v1099, %v1178
    %v1232 = vmul.f32 %v1100, %v1178
    %v1233 = vmul.f32 %v1101, %v1178
    %v1234 = vmul.f32 %v1102, %v1178
    %v1235 = vmul.f32 %v1103, %v1178
    %v1236 = vmul.f32 %v1104, %v1178
    %v1237 = vmul.f32 %v1105, %v1178
    %v1238 = vmul.f32 %v1106, %v1178
    %v1239 = vmul.f32 %v1107, %v1178
    %v1240 = vmul.f32 %v1108, %v1178
    %v1241 = vmul.f32 %v1109, %v1178
    %v1242 = vmul.f32 %v1110, %v1178
    %v1243 = vmul.f32 %v1111, %v1178
    %v1244 = vmul.f32 %v1112, %v1178
    %v1245 = vmul.f32 %v1113, %v1178
    %v1246 = vmul.f32 %v1114, %v1178
    %v1247 = vmul.f32 %v1115, %v1178
    %v1248 = vmul.f32 %v1116, %v1178
    %v1249 = vmul.f32 %v1117, %v1178
    %v1250 = vmul.f32 %v1118, %v1178
    %v1251 = vmul.f32 %v1119, %v1178
    %v1252 = vmul.f32 %v1120, %v1178
    %v1253 = vmul.f32 %v1121, %v1178
    %v1254 = vmul.f32 %v1122, %v1178
    %v1255 = vmul.f32 %v1123, %v1178
    %v1256 = vmul.f32 %v1124, %v1178
    %v1257 = vmul.f32 %v1125, %v1178
    %v1258 = vmul.f32 %v1126, %v1178
    %v1259 = vmul.f32 %v1127, %v1178
    %v1260 = vmul.f32 %v1128, %v1178
    %v1261 = vmul.f32 %v1129, %v1178
    %v1262 = vmul.f32 %v1130, %v1178
    %v1263 = vmul.f32 %v1131, %v1178
    %v1264 = vmul.f32 %v1132, %v1178
    %v1265 = vmul.f32 %v1133, %v1178
    %v1266 = vmul.f32 %v1134, %v1178
    %v1267 = vmul.f32 %v1135, %v1178
    %v1268 = vmul.f32 %v1136, %v1178
    %v1269 = vmul.f32 %v1137, %v1178
    %v1270 = vmul.f32 %v1138, %v1178
    %v1271 = vmul.f32 %v1139, %v1178
    %v1272 = vmul.f32 %v1140, %v1178
    %v1273 = vmul.f32 %v1141, %v1178
    %v1274 = vmul.f32 %v1142, %v1178
    %v1275 = vmul.f32 %v1143, %v1178
    %v1276 = vmul.f32 %v1144, %v1178
    %v1277 = vmul.f32 %v1145, %v1178
    %v1278 = vmul.f32 %v1146, %v1178
    %v1279 = vmul.f32 %v1147, %v1178
    %v1280 = vmul.f32 %v1148, %v1178
    %v1281 = vmul.f32 %v1149, %v1178
    %v1282 = vmul.f32 %v1150, %v1178
    %v1283 = vmul.f32 %v1151, %v1178
    %v1284 = vmul.f32 %v1152, %v1178
    %v1285 = vmul.f32 %v1153, %v1178
    %v1286 = vmul.f32 %v1154, %v1178
    %v1287 = vmul.f32 %v1155, %v1178
    %v1288 = vmul.f32 %v1156, %v1178
    %v1289 = vmul.f32 %v1157, %v1178
    %v1290 = vmul.f32 %v1158, %v1178
    %v1291 = vmul.f32 %v1159, %v1178
    %v1292 = vmul.f32 %v1160, %v1178
    %v1293 = vmul.f32 %v1161, %v1178
    %v1294 = vmul.f32 %v1162, %v1178
    %v1295 = vmul.f32 %v1163, %v1178
    %v1296 = vmul.f32 %v1164, %v1178
    %v1297 = vmul.f32 %v1165, %v1178
    %v1298 = vmul.f32 %v1166, %v1178
    %v1299 = vmul.f32 %v1167, %v1178
    %v1300 = vmul.f32 %v1168, %v1178
    %v1301 = vmul.f32 %v1169, %v1178
    %v1302 = vmul.f32 %v1170, %v1178
    %v1303 = vmul.f32 %v1171, %v1178
    %v1304 = vmul.f32 %v1172, %v1178
    %v1305 = vmul.f32 %v1173, %v1178
    %v1306 = vmul.f32 %v1174, %v1178
    %v1307 = vmul.f32 %v1175, %v1178
    %vm1308 = vcmask 254976
    %v1309 = vsel %vm1308, %v1180, 0.0
    %1310 = vadd.xlane.f32.xlu0 %v1309
    %v1311 = vpop.xlane.xlu0 %1310
    %v1312 = vsel %vm1308, %v1181, 0.0
    %1313 = vadd.xlane.f32.xlu0 %v1312
    %v1314 = vpop.xlane.xlu0 %1313
    %v1315 = vsel %vm1308, %v1182, 0.0
    %1316 = vadd.xlane.f32.xlu0 %v1315
    %v1317 = vpop.xlane.xlu0 %1316
    %v1318 = vsel %vm1308, %v1183, 0.0
    %1319 = vadd.xlane.f32.xlu0 %v1318
    %v1320 = vpop.xlane.xlu0 %1319
    %v1321 = vsel %vm1308, %v1184, 0.0
    %1322 = vadd.xlane.f32.xlu0 %v1321
    %v1323 = vpop.xlane.xlu0 %1322
    %v1324 = vsel %vm1308, %v1185, 0.0
    %1325 = vadd.xlane.f32.xlu0 %v1324
    %v1326 = vpop.xlane.xlu0 %1325
    %v1327 = vsel %vm1308, %v1186, 0.0
    %1328 = vadd.xlane.f32.xlu0 %v1327
    %v1329 = vpop.xlane.xlu0 %1328
    %v1330 = vsel %vm1308, %v1187, 0.0
    %1331 = vadd.xlane.f32.xlu0 %v1330
    %v1332 = vpop.xlane.xlu0 %1331
    %v1333 = vsel %vm1308, %v1188, 0.0
    %1334 = vadd.xlane.f32.xlu0 %v1333
    %v1335 = vpop.xlane.xlu0 %1334
    %v1336 = vsel %vm1308, %v1189, 0.0
    %1337 = vadd.xlane.f32.xlu0 %v1336
    %v1338 = vpop.xlane.xlu0 %1337
    %v1339 = vsel %vm1308, %v1190, 0.0
    %1340 = vadd.xlane.f32.xlu0 %v1339
    %v1341 = vpop.xlane.xlu0 %1340
    %v1342 = vsel %vm1308, %v1191, 0.0
    %1343 = vadd.xlane.f32.xlu0 %v1342
    %v1344 = vpop.xlane.xlu0 %1343
    %v1345 = vsel %vm1308, %v1192, 0.0
    %1346 = vadd.xlane.f32.xlu0 %v1345
    %v1347 = vpop.xlane.xlu0 %1346
    %v1348 = vsel %vm1308, %v1193, 0.0
    %1349 = vadd.xlane.f32.xlu0 %v1348
    %v1350 = vpop.xlane.xlu0 %1349
    %v1351 = vsel %vm1308, %v1194, 0.0
    %1352 = vadd.xlane.f32.xlu0 %v1351
    %v1353 = vpop.xlane.xlu0 %1352
    %v1354 = vsel %vm1308, %v1195, 0.0
    %1355 = vadd.xlane.f32.xlu0 %v1354
    %v1356 = vpop.xlane.xlu0 %1355
    %v1357 = vsel %vm1308, %v1196, 0.0
    %1358 = vadd.xlane.f32.xlu0 %v1357
    %v1359 = vpop.xlane.xlu0 %1358
    %v1360 = vsel %vm1308, %v1197, 0.0
    %1361 = vadd.xlane.f32.xlu0 %v1360
    %v1362 = vpop.xlane.xlu0 %1361
    %v1363 = vsel %vm1308, %v1198, 0.0
    %1364 = vadd.xlane.f32.xlu0 %v1363
    %v1365 = vpop.xlane.xlu0 %1364
    %v1366 = vsel %vm1308, %v1199, 0.0
    %1367 = vadd.xlane.f32.xlu0 %v1366
    %v1368 = vpop.xlane.xlu0 %1367
    %v1369 = vsel %vm1308, %v1200, 0.0
    %1370 = vadd.xlane.f32.xlu0 %v1369
    %v1371 = vpop.xlane.xlu0 %1370
    %v1372 = vsel %vm1308, %v1201, 0.0
    %1373 = vadd.xlane.f32.xlu0 %v1372
    %v1374 = vpop.xlane.xlu0 %1373
    %v1375 = vsel %vm1308, %v1202, 0.0
    %1376 = vadd.xlane.f32.xlu0 %v1375
    %v1377 = vpop.xlane.xlu0 %1376
    %v1378 = vsel %vm1308, %v1203, 0.0
    %1379 = vadd.xlane.f32.xlu0 %v1378
    %v1380 = vpop.xlane.xlu0 %1379
    %v1381 = vsel %vm1308, %v1204, 0.0
    %1382 = vadd.xlane.f32.xlu0 %v1381
    %v1383 = vpop.xlane.xlu0 %1382
    %v1384 = vsel %vm1308, %v1205, 0.0
    %1385 = vadd.xlane.f32.xlu0 %v1384
    %v1386 = vpop.xlane.xlu0 %1385
    %v1387 = vsel %vm1308, %v1206, 0.0
    %1388 = vadd.xlane.f32.xlu0 %v1387
    %v1389 = vpop.xlane.xlu0 %1388
    %v1390 = vsel %vm1308, %v1207, 0.0
    %1391 = vadd.xlane.f32.xlu0 %v1390
    %v1392 = vpop.xlane.xlu0 %1391
    %v1393 = vsel %vm1308, %v1208, 0.0
    %1394 = vadd.xlane.f32.xlu0 %v1393
    %v1395 = vpop.xlane.xlu0 %1394
    %v1396 = vsel %vm1308, %v1209, 0.0
    %1397 = vadd.xlane.f32.xlu0 %v1396
    %v1398 = vpop.xlane.xlu0 %1397
    %v1399 = vsel %vm1308, %v1210, 0.0
    %1400 = vadd.xlane.f32.xlu0 %v1399
    %v1401 = vpop.xlane.xlu0 %1400
    %v1402 = vsel %vm1308, %v1211, 0.0
    %1403 = vadd.xlane.f32.xlu0 %v1402
    %v1404 = vpop.xlane.xlu0 %1403
    %v1405 = vsel %vm1308, %v1212, 0.0
    %1406 = vadd.xlane.f32.xlu0 %v1405
    %v1407 = vpop.xlane.xlu0 %1406
    %v1408 = vsel %vm1308, %v1213, 0.0
    %1409 = vadd.xlane.f32.xlu0 %v1408
    %v1410 = vpop.xlane.xlu0 %1409
    %v1411 = vsel %vm1308, %v1214, 0.0
    %1412 = vadd.xlane.f32.xlu0 %v1411
    %v1413 = vpop.xlane.xlu0 %1412
    %v1414 = vsel %vm1308, %v1215, 0.0
    %1415 = vadd.xlane.f32.xlu0 %v1414
    %v1416 = vpop.xlane.xlu0 %1415
    %v1417 = vsel %vm1308, %v1216, 0.0
    %1418 = vadd.xlane.f32.xlu0 %v1417
    %v1419 = vpop.xlane.xlu0 %1418
    %v1420 = vsel %vm1308, %v1217, 0.0
    %1421 = vadd.xlane.f32.xlu0 %v1420
    %v1422 = vpop.xlane.xlu0 %1421
    %v1423 = vsel %vm1308, %v1218, 0.0
    %1424 = vadd.xlane.f32.xlu0 %v1423
    %v1425 = vpop.xlane.xlu0 %1424
    %v1426 = vsel %vm1308, %v1219, 0.0
    %1427 = vadd.xlane.f32.xlu0 %v1426
    %v1428 = vpop.xlane.xlu0 %1427
    %v1429 = vsel %vm1308, %v1220, 0.0
    %1430 = vadd.xlane.f32.xlu0 %v1429
    %v1431 = vpop.xlane.xlu0 %1430
    %v1432 = vsel %vm1308, %v1221, 0.0
    %1433 = vadd.xlane.f32.xlu0 %v1432
    %v1434 = vpop.xlane.xlu0 %1433
    %v1435 = vsel %vm1308, %v1222, 0.0
    %1436 = vadd.xlane.f32.xlu0 %v1435
    %v1437 = vpop.xlane.xlu0 %1436
    %v1438 = vsel %vm1308, %v1223, 0.0
    %1439 = vadd.xlane.f32.xlu0 %v1438
    %v1440 = vpop.xlane.xlu0 %1439
    %v1441 = vsel %vm1308, %v1224, 0.0
    %1442 = vadd.xlane.f32.xlu0 %v1441
    %v1443 = vpop.xlane.xlu0 %1442
    %v1444 = vsel %vm1308, %v1225, 0.0
    %1445 = vadd.xlane.f32.xlu0 %v1444
    %v1446 = vpop.xlane.xlu0 %1445
    %v1447 = vsel %vm1308, %v1226, 0.0
    %1448 = vadd.xlane.f32.xlu0 %v1447
    %v1449 = vpop.xlane.xlu0 %1448
    %v1450 = vsel %vm1308, %v1227, 0.0
    %1451 = vadd.xlane.f32.xlu0 %v1450
    %v1452 = vpop.xlane.xlu0 %1451
    %v1453 = vsel %vm1308, %v1228, 0.0
    %1454 = vadd.xlane.f32.xlu0 %v1453
    %v1455 = vpop.xlane.xlu0 %1454
    %v1456 = vsel %vm1308, %v1229, 0.0
    %1457 = vadd.xlane.f32.xlu0 %v1456
    %v1458 = vpop.xlane.xlu0 %1457
    %v1459 = vsel %vm1308, %v1230, 0.0
    %1460 = vadd.xlane.f32.xlu0 %v1459
    %v1461 = vpop.xlane.xlu0 %1460
    %v1462 = vsel %vm1308, %v1231, 0.0
    %1463 = vadd.xlane.f32.xlu0 %v1462
    %v1464 = vpop.xlane.xlu0 %1463
    %v1465 = vsel %vm1308, %v1232, 0.0
    %1466 = vadd.xlane.f32.xlu0 %v1465
    %v1467 = vpop.xlane.xlu0 %1466
    %v1468 = vsel %vm1308, %v1233, 0.0
    %1469 = vadd.xlane.f32.xlu0 %v1468
    %v1470 = vpop.xlane.xlu0 %1469
    %v1471 = vsel %vm1308, %v1234, 0.0
    %1472 = vadd.xlane.f32.xlu0 %v1471
    %v1473 = vpop.xlane.xlu0 %1472
    %v1474 = vsel %vm1308, %v1235, 0.0
    %1475 = vadd.xlane.f32.xlu0 %v1474
    %v1476 = vpop.xlane.xlu0 %1475
    %v1477 = vsel %vm1308, %v1236, 0.0
    %1478 = vadd.xlane.f32.xlu0 %v1477
    %v1479 = vpop.xlane.xlu0 %1478
    %v1480 = vsel %vm1308, %v1237, 0.0
    %1481 = vadd.xlane.f32.xlu0 %v1480
    %v1482 = vpop.xlane.xlu0 %1481
    %v1483 = vsel %vm1308, %v1238, 0.0
    %1484 = vadd.xlane.f32.xlu0 %v1483
    %v1485 = vpop.xlane.xlu0 %1484
    %v1486 = vsel %vm1308, %v1239, 0.0
    %1487 = vadd.xlane.f32.xlu0 %v1486
    %v1488 = vpop.xlane.xlu0 %1487
    %v1489 = vsel %vm1308, %v1240, 0.0
    %1490 = vadd.xlane.f32.xlu0 %v1489
    %v1491 = vpop.xlane.xlu0 %1490
    %v1492 = vsel %vm1308, %v1241, 0.0
    %1493 = vadd.xlane.f32.xlu0 %v1492
    %v1494 = vpop.xlane.xlu0 %1493
    %v1495 = vsel %vm1308, %v1242, 0.0
    %1496 = vadd.xlane.f32.xlu0 %v1495
    %v1497 = vpop.xlane.xlu0 %1496
    %v1498 = vsel %vm1308, %v1243, 0.0
    %1499 = vadd.xlane.f32.xlu0 %v1498
    %v1500 = vpop.xlane.xlu0 %1499
    %v1501 = vsel %vm1308, %v1244, 0.0
    %1502 = vadd.xlane.f32.xlu0 %v1501
    %v1503 = vpop.xlane.xlu0 %1502
    %v1504 = vsel %vm1308, %v1245, 0.0
    %1505 = vadd.xlane.f32.xlu0 %v1504
    %v1506 = vpop.xlane.xlu0 %1505
    %v1507 = vsel %vm1308, %v1246, 0.0
    %1508 = vadd.xlane.f32.xlu0 %v1507
    %v1509 = vpop.xlane.xlu0 %1508
    %v1510 = vsel %vm1308, %v1247, 0.0
    %1511 = vadd.xlane.f32.xlu0 %v1510
    %v1512 = vpop.xlane.xlu0 %1511
    %v1513 = vsel %vm1308, %v1248, 0.0
    %1514 = vadd.xlane.f32.xlu0 %v1513
    %v1515 = vpop.xlane.xlu0 %1514
    %v1516 = vsel %vm1308, %v1249, 0.0
    %1517 = vadd.xlane.f32.xlu0 %v1516
    %v1518 = vpop.xlane.xlu0 %1517
    %v1519 = vsel %vm1308, %v1250, 0.0
    %1520 = vadd.xlane.f32.xlu0 %v1519
    %v1521 = vpop.xlane.xlu0 %1520
    %v1522 = vsel %vm1308, %v1251, 0.0
    %1523 = vadd.xlane.f32.xlu0 %v1522
    %v1524 = vpop.xlane.xlu0 %1523
    %v1525 = vsel %vm1308, %v1252, 0.0
    %1526 = vadd.xlane.f32.xlu0 %v1525
    %v1527 = vpop.xlane.xlu0 %1526
    %v1528 = vsel %vm1308, %v1253, 0.0
    %1529 = vadd.xlane.f32.xlu0 %v1528
    %v1530 = vpop.xlane.xlu0 %1529
    %v1531 = vsel %vm1308, %v1254, 0.0
    %1532 = vadd.xlane.f32.xlu0 %v1531
    %v1533 = vpop.xlane.xlu0 %1532
    %v1534 = vsel %vm1308, %v1255, 0.0
    %1535 = vadd.xlane.f32.xlu0 %v1534
    %v1536 = vpop.xlane.xlu0 %1535
    %v1537 = vsel %vm1308, %v1256, 0.0
    %1538 = vadd.xlane.f32.xlu0 %v1537
    %v1539 = vpop.xlane.xlu0 %1538
    %v1540 = vsel %vm1308, %v1257, 0.0
    %1541 = vadd.xlane.f32.xlu0 %v1540
    %v1542 = vpop.xlane.xlu0 %1541
    %v1543 = vsel %vm1308, %v1258, 0.0
    %1544 = vadd.xlane.f32.xlu0 %v1543
    %v1545 = vpop.xlane.xlu0 %1544
    %v1546 = vsel %vm1308, %v1259, 0.0
    %1547 = vadd.xlane.f32.xlu0 %v1546
    %v1548 = vpop.xlane.xlu0 %1547
    %v1549 = vsel %vm1308, %v1260, 0.0
    %1550 = vadd.xlane.f32.xlu0 %v1549
    %v1551 = vpop.xlane.xlu0 %1550
    %v1552 = vsel %vm1308, %v1261, 0.0
    %1553 = vadd.xlane.f32.xlu0 %v1552
    %v1554 = vpop.xlane.xlu0 %1553
    %v1555 = vsel %vm1308, %v1262, 0.0
    %1556 = vadd.xlane.f32.xlu0 %v1555
    %v1557 = vpop.xlane.xlu0 %1556
    %v1558 = vsel %vm1308, %v1263, 0.0
    %1559 = vadd.xlane.f32.xlu0 %v1558
    %v1560 = vpop.xlane.xlu0 %1559
    %v1561 = vsel %vm1308, %v1264, 0.0
    %1562 = vadd.xlane.f32.xlu0 %v1561
    %v1563 = vpop.xlane.xlu0 %1562
    %v1564 = vsel %vm1308, %v1265, 0.0
    %1565 = vadd.xlane.f32.xlu0 %v1564
    %v1566 = vpop.xlane.xlu0 %1565
    %v1567 = vsel %vm1308, %v1266, 0.0
    %1568 = vadd.xlane.f32.xlu0 %v1567
    %v1569 = vpop.xlane.xlu0 %1568
    %v1570 = vsel %vm1308, %v1267, 0.0
    %1571 = vadd.xlane.f32.xlu0 %v1570
    %v1572 = vpop.xlane.xlu0 %1571
    %v1573 = vsel %vm1308, %v1268, 0.0
    %1574 = vadd.xlane.f32.xlu0 %v1573
    %v1575 = vpop.xlane.xlu0 %1574
    %v1576 = vsel %vm1308, %v1269, 0.0
    %1577 = vadd.xlane.f32.xlu0 %v1576
    %v1578 = vpop.xlane.xlu0 %1577
    %v1579 = vsel %vm1308, %v1270, 0.0
    %1580 = vadd.xlane.f32.xlu0 %v1579
    %v1581 = vpop.xlane.xlu0 %1580
    %v1582 = vsel %vm1308, %v1271, 0.0
    %1583 = vadd.xlane.f32.xlu0 %v1582
    %v1584 = vpop.xlane.xlu0 %1583
    %v1585 = vsel %vm1308, %v1272, 0.0
    %1586 = vadd.xlane.f32.xlu0 %v1585
    %v1587 = vpop.xlane.xlu0 %1586
    %v1588 = vsel %vm1308, %v1273, 0.0
    %1589 = vadd.xlane.f32.xlu0 %v1588
    %v1590 = vpop.xlane.xlu0 %1589
    %v1591 = vsel %vm1308, %v1274, 0.0
    %1592 = vadd.xlane.f32.xlu0 %v1591
    %v1593 = vpop.xlane.xlu0 %1592
    %v1594 = vsel %vm1308, %v1275, 0.0
    %1595 = vadd.xlane.f32.xlu0 %v1594
    %v1596 = vpop.xlane.xlu0 %1595
    %v1597 = vsel %vm1308, %v1276, 0.0
    %1598 = vadd.xlane.f32.xlu0 %v1597
    %v1599 = vpop.xlane.xlu0 %1598
    %v1600 = vsel %vm1308, %v1277, 0.0
    %1601 = vadd.xlane.f32.xlu0 %v1600
    %v1602 = vpop.xlane.xlu0 %1601
    %v1603 = vsel %vm1308, %v1278, 0.0
    %1604 = vadd.xlane.f32.xlu0 %v1603
    %v1605 = vpop.xlane.xlu0 %1604
    %v1606 = vsel %vm1308, %v1279, 0.0
    %1607 = vadd.xlane.f32.xlu0 %v1606
    %v1608 = vpop.xlane.xlu0 %1607
    %v1609 = vsel %vm1308, %v1280, 0.0
    %1610 = vadd.xlane.f32.xlu0 %v1609
    %v1611 = vpop.xlane.xlu0 %1610
    %v1612 = vsel %vm1308, %v1281, 0.0
    %1613 = vadd.xlane.f32.xlu0 %v1612
    %v1614 = vpop.xlane.xlu0 %1613
    %v1615 = vsel %vm1308, %v1282, 0.0
    %1616 = vadd.xlane.f32.xlu0 %v1615
    %v1617 = vpop.xlane.xlu0 %1616
    %v1618 = vsel %vm1308, %v1283, 0.0
    %1619 = vadd.xlane.f32.xlu0 %v1618
    %v1620 = vpop.xlane.xlu0 %1619
    %v1621 = vsel %vm1308, %v1284, 0.0
    %1622 = vadd.xlane.f32.xlu0 %v1621
    %v1623 = vpop.xlane.xlu0 %1622
    %v1624 = vsel %vm1308, %v1285, 0.0
    %1625 = vadd.xlane.f32.xlu0 %v1624
    %v1626 = vpop.xlane.xlu0 %1625
    %v1627 = vsel %vm1308, %v1286, 0.0
    %1628 = vadd.xlane.f32.xlu0 %v1627
    %v1629 = vpop.xlane.xlu0 %1628
    %v1630 = vsel %vm1308, %v1287, 0.0
    %1631 = vadd.xlane.f32.xlu0 %v1630
    %v1632 = vpop.xlane.xlu0 %1631
    %v1633 = vsel %vm1308, %v1288, 0.0
    %1634 = vadd.xlane.f32.xlu0 %v1633
    %v1635 = vpop.xlane.xlu0 %1634
    %v1636 = vsel %vm1308, %v1289, 0.0
    %1637 = vadd.xlane.f32.xlu0 %v1636
    %v1638 = vpop.xlane.xlu0 %1637
    %v1639 = vsel %vm1308, %v1290, 0.0
    %1640 = vadd.xlane.f32.xlu0 %v1639
    %v1641 = vpop.xlane.xlu0 %1640
    %v1642 = vsel %vm1308, %v1291, 0.0
    %1643 = vadd.xlane.f32.xlu0 %v1642
    %v1644 = vpop.xlane.xlu0 %1643
    %v1645 = vsel %vm1308, %v1292, 0.0
    %1646 = vadd.xlane.f32.xlu0 %v1645
    %v1647 = vpop.xlane.xlu0 %1646
    %v1648 = vsel %vm1308, %v1293, 0.0
    %1649 = vadd.xlane.f32.xlu0 %v1648
    %v1650 = vpop.xlane.xlu0 %1649
    %v1651 = vsel %vm1308, %v1294, 0.0
    %1652 = vadd.xlane.f32.xlu0 %v1651
    %v1653 = vpop.xlane.xlu0 %1652
    %v1654 = vsel %vm1308, %v1295, 0.0
    %1655 = vadd.xlane.f32.xlu0 %v1654
    %v1656 = vpop.xlane.xlu0 %1655
    %v1657 = vsel %vm1308, %v1296, 0.0
    %1658 = vadd.xlane.f32.xlu0 %v1657
    %v1659 = vpop.xlane.xlu0 %1658
    %v1660 = vsel %vm1308, %v1297, 0.0
    %1661 = vadd.xlane.f32.xlu0 %v1660
    %v1662 = vpop.xlane.xlu0 %1661
    %v1663 = vsel %vm1308, %v1298, 0.0
    %1664 = vadd.xlane.f32.xlu0 %v1663
    %v1665 = vpop.xlane.xlu0 %1664
    %v1666 = vsel %vm1308, %v1299, 0.0
    %1667 = vadd.xlane.f32.xlu0 %v1666
    %v1668 = vpop.xlane.xlu0 %1667
    %v1669 = vsel %vm1308, %v1300, 0.0
    %1670 = vadd.xlane.f32.xlu0 %v1669
    %v1671 = vpop.xlane.xlu0 %1670
    %v1672 = vsel %vm1308, %v1301, 0.0
    %1673 = vadd.xlane.f32.xlu0 %v1672
    %v1674 = vpop.xlane.xlu0 %1673
    %v1675 = vsel %vm1308, %v1302, 0.0
    %1676 = vadd.xlane.f32.xlu0 %v1675
    %v1677 = vpop.xlane.xlu0 %1676
    %v1678 = vsel %vm1308, %v1303, 0.0
    %1679 = vadd.xlane.f32.xlu0 %v1678
    %v1680 = vpop.xlane.xlu0 %1679
    %v1681 = vsel %vm1308, %v1304, 0.0
    %1682 = vadd.xlane.f32.xlu0 %v1681
    %v1683 = vpop.xlane.xlu0 %1682
    %v1684 = vsel %vm1308, %v1305, 0.0
    %1685 = vadd.xlane.f32.xlu0 %v1684
    %v1686 = vpop.xlane.xlu0 %1685
    %v1687 = vsel %vm1308, %v1306, 0.0
    %1688 = vadd.xlane.f32.xlu0 %v1687
    %v1689 = vpop.xlane.xlu0 %1688
    %v1690 = vsel %vm1308, %v1307, 0.0
    %1691 = vadd.xlane.f32.xlu0 %v1690
    %v1692 = vpop.xlane.xlu0 %1691
    %s1693 = smul.u32 0, 128
    %v1822 = vlaneseq
    %v1823 = vand.u32 %v1822, 127
    %v1824 = vperm.slane %v1311, %v1823
    %v1825 = vperm.slane %v1314, %v1823
    %v1826 = vperm.slane %v1317, %v1823
    %v1827 = vperm.slane %v1320, %v1823
    %v1828 = vperm.slane %v1323, %v1823
    %v1829 = vperm.slane %v1326, %v1823
    %v1830 = vperm.slane %v1329, %v1823
    %v1831 = vperm.slane %v1332, %v1823
    %v1832 = vperm.slane %v1335, %v1823
    %v1833 = vperm.slane %v1338, %v1823
    %v1834 = vperm.slane %v1341, %v1823
    %v1835 = vperm.slane %v1344, %v1823
    %v1836 = vperm.slane %v1347, %v1823
    %v1837 = vperm.slane %v1350, %v1823
    %v1838 = vperm.slane %v1353, %v1823
    %v1839 = vperm.slane %v1356, %v1823
    %v1840 = vperm.slane %v1359, %v1823
    %v1841 = vperm.slane %v1362, %v1823
    %v1842 = vperm.slane %v1365, %v1823
    %v1843 = vperm.slane %v1368, %v1823
    %v1844 = vperm.slane %v1371, %v1823
    %v1845 = vperm.slane %v1374, %v1823
    %v1846 = vperm.slane %v1377, %v1823
    %v1847 = vperm.slane %v1380, %v1823
    %v1848 = vperm.slane %v1383, %v1823
    %v1849 = vperm.slane %v1386, %v1823
    %v1850 = vperm.slane %v1389, %v1823
    %v1851 = vperm.slane %v1392, %v1823
    %v1852 = vperm.slane %v1395, %v1823
    %v1853 = vperm.slane %v1398, %v1823
    %v1854 = vperm.slane %v1401, %v1823
    %v1855 = vperm.slane %v1404, %v1823
    %v1856 = vperm.slane %v1407, %v1823
    %v1857 = vperm.slane %v1410, %v1823
    %v1858 = vperm.slane %v1413, %v1823
    %v1859 = vperm.slane %v1416, %v1823
    %v1860 = vperm.slane %v1419, %v1823
    %v1861 = vperm.slane %v1422, %v1823
    %v1862 = vperm.slane %v1425, %v1823
    %v1863 = vperm.slane %v1428, %v1823
    %v1864 = vperm.slane %v1431, %v1823
    %v1865 = vperm.slane %v1434, %v1823
    %v1866 = vperm.slane %v1437, %v1823
    %v1867 = vperm.slane %v1440, %v1823
    %v1868 = vperm.slane %v1443, %v1823
    %v1869 = vperm.slane %v1446, %v1823
    %v1870 = vperm.slane %v1449, %v1823
    %v1871 = vperm.slane %v1452, %v1823
    %v1872 = vperm.slane %v1455, %v1823
    %v1873 = vperm.slane %v1458, %v1823
    %v1874 = vperm.slane %v1461, %v1823
    %v1875 = vperm.slane %v1464, %v1823
    %v1876 = vperm.slane %v1467, %v1823
    %v1877 = vperm.slane %v1470, %v1823
    %v1878 = vperm.slane %v1473, %v1823
    %v1879 = vperm.slane %v1476, %v1823
    %v1880 = vperm.slane %v1479, %v1823
    %v1881 = vperm.slane %v1482, %v1823
    %v1882 = vperm.slane %v1485, %v1823
    %v1883 = vperm.slane %v1488, %v1823
    %v1884 = vperm.slane %v1491, %v1823
    %v1885 = vperm.slane %v1494, %v1823
    %v1886 = vperm.slane %v1497, %v1823
    %v1887 = vperm.slane %v1500, %v1823
    %v1888 = vperm.slane %v1503, %v1823
    %v1889 = vperm.slane %v1506, %v1823
    %v1890 = vperm.slane %v1509, %v1823
    %v1891 = vperm.slane %v1512, %v1823
    %v1892 = vperm.slane %v1515, %v1823
    %v1893 = vperm.slane %v1518, %v1823
    %v1894 = vperm.slane %v1521, %v1823
    %v1895 = vperm.slane %v1524, %v1823
    %v1896 = vperm.slane %v1527, %v1823
    %v1897 = vperm.slane %v1530, %v1823
    %v1898 = vperm.slane %v1533, %v1823
    %v1899 = vperm.slane %v1536, %v1823
    %v1900 = vperm.slane %v1539, %v1823
    %v1901 = vperm.slane %v1542, %v1823
    %v1902 = vperm.slane %v1545, %v1823
    %v1903 = vperm.slane %v1548, %v1823
    %v1904 = vperm.slane %v1551, %v1823
    %v1905 = vperm.slane %v1554, %v1823
    %v1906 = vperm.slane %v1557, %v1823
    %v1907 = vperm.slane %v1560, %v1823
    %v1908 = vperm.slane %v1563, %v1823
    %v1909 = vperm.slane %v1566, %v1823
    %v1910 = vperm.slane %v1569, %v1823
    %v1911 = vperm.slane %v1572, %v1823
    %v1912 = vperm.slane %v1575, %v1823
    %v1913 = vperm.slane %v1578, %v1823
    %v1914 = vperm.slane %v1581, %v1823
    %v1915 = vperm.slane %v1584, %v1823
    %v1916 = vperm.slane %v1587, %v1823
    %v1917 = vperm.slane %v1590, %v1823
    %v1918 = vperm.slane %v1593, %v1823
    %v1919 = vperm.slane %v1596, %v1823
    %v1920 = vperm.slane %v1599, %v1823
    %v1921 = vperm.slane %v1602, %v1823
    %v1922 = vperm.slane %v1605, %v1823
    %v1923 = vperm.slane %v1608, %v1823
    %v1924 = vperm.slane %v1611, %v1823
    %v1925 = vperm.slane %v1614, %v1823
    %v1926 = vperm.slane %v1617, %v1823
    %v1927 = vperm.slane %v1620, %v1823
    %v1928 = vperm.slane %v1623, %v1823
    %v1929 = vperm.slane %v1626, %v1823
    %v1930 = vperm.slane %v1629, %v1823
    %v1931 = vperm.slane %v1632, %v1823
    %v1932 = vperm.slane %v1635, %v1823
    %v1933 = vperm.slane %v1638, %v1823
    %v1934 = vperm.slane %v1641, %v1823
    %v1935 = vperm.slane %v1644, %v1823
    %v1936 = vperm.slane %v1647, %v1823
    %v1937 = vperm.slane %v1650, %v1823
    %v1938 = vperm.slane %v1653, %v1823
    %v1939 = vperm.slane %v1656, %v1823
    %v1940 = vperm.slane %v1659, %v1823
    %v1941 = vperm.slane %v1662, %v1823
    %v1942 = vperm.slane %v1665, %v1823
    %v1943 = vperm.slane %v1668, %v1823
    %v1944 = vperm.slane %v1671, %v1823
    %v1945 = vperm.slane %v1674, %v1823
    %v1946 = vperm.slane %v1677, %v1823
    %v1947 = vperm.slane %v1680, %v1823
    %v1948 = vperm.slane %v1683, %v1823
    %v1949 = vperm.slane %v1686, %v1823
    %v1950 = vperm.slane %v1689, %v1823
    %v1951 = vperm.slane %v1692, %v1823
    %vm1952 = vcmask 1041409
    %v1953 = vsel %vm1952, %v1825, %v1824
    %vm1954 = vcmask 1042434
    %v1955 = vsel %vm1954, %v1826, %v1953
    %vm1956 = vcmask 1043459
    %v1957 = vsel %vm1956, %v1827, %v1955
    %vm1958 = vcmask 1044484
    %v1959 = vsel %vm1958, %v1828, %v1957
    %vm1960 = vcmask 1045509
    %v1961 = vsel %vm1960, %v1829, %v1959
    %vm1962 = vcmask 1046534
    %v1963 = vsel %vm1962, %v1830, %v1961
    %vm1964 = vcmask 1047559
    %v1965 = vsel %vm1964, %v1831, %v1963
    %v1966 = vsel %vm1952, %v1833, %v1832
    %v1967 = vsel %vm1954, %v1834, %v1966
    %v1968 = vsel %vm1956, %v1835, %v1967
    %v1969 = vsel %vm1958, %v1836, %v1968
    %v1970 = vsel %vm1960, %v1837, %v1969
    %v1971 = vsel %vm1962, %v1838, %v1970
    %v1972 = vsel %vm1964, %v1839, %v1971
    %v1973 = vsel %vm1952, %v1841, %v1840
    %v1974 = vsel %vm1954, %v1842, %v1973
    %v1975 = vsel %vm1956, %v1843, %v1974
    %v1976 = vsel %vm1958, %v1844, %v1975
    %v1977 = vsel %vm1960, %v1845, %v1976
    %v1978 = vsel %vm1962, %v1846, %v1977
    %v1979 = vsel %vm1964, %v1847, %v1978
    %v1980 = vsel %vm1952, %v1849, %v1848
    %v1981 = vsel %vm1954, %v1850, %v1980
    %v1982 = vsel %vm1956, %v1851, %v1981
    %v1983 = vsel %vm1958, %v1852, %v1982
    %v1984 = vsel %vm1960, %v1853, %v1983
    %v1985 = vsel %vm1962, %v1854, %v1984
    %v1986 = vsel %vm1964, %v1855, %v1985
    %v1987 = vsel %vm1952, %v1857, %v1856
    %v1988 = vsel %vm1954, %v1858, %v1987
    %v1989 = vsel %vm1956, %v1859, %v1988
    %v1990 = vsel %vm1958, %v1860, %v1989
    %v1991 = vsel %vm1960, %v1861, %v1990
    %v1992 = vsel %vm1962, %v1862, %v1991
    %v1993 = vsel %vm1964, %v1863, %v1992
    %v1994 = vsel %vm1952, %v1865, %v1864
    %v1995 = vsel %vm1954, %v1866, %v1994
    %v1996 = vsel %vm1956, %v1867, %v1995
    %v1997 = vsel %vm1958, %v1868, %v1996
    %v1998 = vsel %vm1960, %v1869, %v1997
    %v1999 = vsel %vm1962, %v1870, %v1998
    %v2000 = vsel %vm1964, %v1871, %v1999
    %v2001 = vsel %vm1952, %v1873, %v1872
    %v2002 = vsel %vm1954, %v1874, %v2001
    %v2003 = vsel %vm1956, %v1875, %v2002
    %v2004 = vsel %vm1958, %v1876, %v2003
    %v2005 = vsel %vm1960, %v1877, %v2004
    %v2006 = vsel %vm1962, %v1878, %v2005
    %v2007 = vsel %vm1964, %v1879, %v2006
    %v2008 = vsel %vm1952, %v1881, %v1880
    %v2009 = vsel %vm1954, %v1882, %v2008
    %v2010 = vsel %vm1956, %v1883, %v2009
    %v2011 = vsel %vm1958, %v1884, %v2010
    %v2012 = vsel %vm1960, %v1885, %v2011
    %v2013 = vsel %vm1962, %v1886, %v2012
    %v2014 = vsel %vm1964, %v1887, %v2013
    %v2015 = vsel %vm1952, %v1889, %v1888
    %v2016 = vsel %vm1954, %v1890, %v2015
    %v2017 = vsel %vm1956, %v1891, %v2016
    %v2018 = vsel %vm1958, %v1892, %v2017
    %v2019 = vsel %vm1960, %v1893, %v2018
    %v2020 = vsel %vm1962, %v1894, %v2019
    %v2021 = vsel %vm1964, %v1895, %v2020
    %v2022 = vsel %vm1952, %v1897, %v1896
    %v2023 = vsel %vm1954, %v1898, %v2022
    %v2024 = vsel %vm1956, %v1899, %v2023
    %v2025 = vsel %vm1958, %v1900, %v2024
    %v2026 = vsel %vm1960, %v1901, %v2025
    %v2027 = vsel %vm1962, %v1902, %v2026
    %v2028 = vsel %vm1964, %v1903, %v2027
    %v2029 = vsel %vm1952, %v1905, %v1904
    %v2030 = vsel %vm1954, %v1906, %v2029
    %v2031 = vsel %vm1956, %v1907, %v2030
    %v2032 = vsel %vm1958, %v1908, %v2031
    %v2033 = vsel %vm1960, %v1909, %v2032
    %v2034 = vsel %vm1962, %v1910, %v2033
    %v2035 = vsel %vm1964, %v1911, %v2034
    %v2036 = vsel %vm1952, %v1913, %v1912
    %v2037 = vsel %vm1954, %v1914, %v2036
    %v2038 = vsel %vm1956, %v1915, %v2037
    %v2039 = vsel %vm1958, %v1916, %v2038
    %v2040 = vsel %vm1960, %v1917, %v2039
    %v2041 = vsel %vm1962, %v1918, %v2040
    %v2042 = vsel %vm1964, %v1919, %v2041
    %v2043 = vsel %vm1952, %v1921, %v1920
    %v2044 = vsel %vm1954, %v1922, %v2043
    %v2045 = vsel %vm1956, %v1923, %v2044
    %v2046 = vsel %vm1958, %v1924, %v2045
    %v2047 = vsel %vm1960, %v1925, %v2046
    %v2048 = vsel %vm1962, %v1926, %v2047
    %v2049 = vsel %vm1964, %v1927, %v2048
    %v2050 = vsel %vm1952, %v1929, %v1928
    %v2051 = vsel %vm1954, %v1930, %v2050
    %v2052 = vsel %vm1956, %v1931, %v2051
    %v2053 = vsel %vm1958, %v1932, %v2052
    %v2054 = vsel %vm1960, %v1933, %v2053
    %v2055 = vsel %vm1962, %v1934, %v2054
    %v2056 = vsel %vm1964, %v1935, %v2055
    %v2057 = vsel %vm1952, %v1937, %v1936
    %v2058 = vsel %vm1954, %v1938, %v2057
    %v2059 = vsel %vm1956, %v1939, %v2058
    %v2060 = vsel %vm1958, %v1940, %v2059
    %v2061 = vsel %vm1960, %v1941, %v2060
    %v2062 = vsel %vm1962, %v1942, %v2061
    %v2063 = vsel %vm1964, %v1943, %v2062
    %v2064 = vsel %vm1952, %v1945, %v1944
    %v2065 = vsel %vm1954, %v1946, %v2064
    %v2066 = vsel %vm1956, %v1947, %v2065
    %v2067 = vsel %vm1958, %v1948, %v2066
    %v2068 = vsel %vm1960, %v1949, %v2067
    %v2069 = vsel %vm1962, %v1950, %v2068
    %v2070 = vsel %vm1964, %v1951, %v2069
    %2087 = vxpose.xlu0.b32.start [1/16] %v1965, 128
    %2088 = vxpose.xlu0.b32.cont [2/16] %v1972, 128
    %2089 = vxpose.xlu0.b32.cont [3/16] %v1979, 128
    %2090 = vxpose.xlu0.b32.cont [4/16] %v1986, 128
    %2091 = vxpose.xlu0.b32.cont [5/16] %v1993, 128
    %2092 = vxpose.xlu0.b32.cont [6/16] %v2000, 128
    %2093 = vxpose.xlu0.b32.cont [7/16] %v2007, 128
    %2094 = vxpose.xlu0.b32.cont [8/16] %v2014, 128
    %2095 = vxpose.xlu0.b32.cont [9/16] %v2021, 128
    %2096 = vxpose.xlu0.b32.cont [10/16] %v2028, 128
    %2097 = vxpose.xlu0.b32.cont [11/16] %v2035, 128
    %2098 = vxpose.xlu0.b32.cont [12/16] %v2042, 128
    %2099 = vxpose.xlu0.b32.cont [13/16] %v2049, 128
    %2100 = vxpose.xlu0.b32.cont [14/16] %v2056, 128
    %2101 = vxpose.xlu0.b32.cont [15/16] %v2063, 128
    %2102 = vxpose.xlu0.b32.end [16/16] %v2070, 128
    %v2103 = vpop.trf.xlu0
    %v2104 = vpop.trf.xlu0
    %v2105 = vpop.trf.xlu0
    %v2106 = vpop.trf.xlu0
    %v2107 = vpop.trf.xlu0
    %v2108 = vpop.trf.xlu0
    %v2109 = vpop.trf.xlu0
    %v2110 = vpop.trf.xlu0
    %v2111 = vpop.trf.xlu0
    %v2112 = vpop.trf.xlu0
    %v2113 = vpop.trf.xlu0
    %v2114 = vpop.trf.xlu0
    %v2115 = vpop.trf.xlu0
    %v2116 = vpop.trf.xlu0
    %v2117 = vpop.trf.xlu0
    %v2118 = vpop.trf.xlu0
    %s2119 = sshra.s32 %s1693, 7
    %s2120 = sand.u32 %s1693, 127
    %s2121 = scalar_lea.vmem [#allocation2], %s2119
    %2122 = vst [vmem:[%s2121] sm:$0x3] %v2103
    %p2123 = scmp.eq.s32.totalorder 0, 0
    // Predicated region
    $region18: #{tpu_custom_call.1} parent=1 // pred_check
      %p2124 = pneg %p2123
    $region19: #{tpu_custom_call.1} parent=1 // pred_check_branch
      %2126 = sbr.rel (%p2124) target = $region21
    $region20: #{tpu_custom_call.1} parent=1 // pred_region
      %v2127 = vld [vmem:[#allocation2] sm:$0x3]
      %vm2128 = vcmp.lt.s32.totalorder %v1823, 8
      %v2129 = vsel %vm2128, %v2127, -inf
      %vm2130 = vcmask 1041408
      %v2131 = vsel %vm2130, %v2129, -inf
      %2132 = vmax.xlane.f32.xlu0 %v2131
      %v2133 = vpop.xlane.xlu0 %2132
      %v2134 = vsub.f32 %v2129, %v2133
      %v2135 = vmul.f32 %v2134, 1.442695
      %v2136 = vpow.pop %v2135
      %v2137 = vsel %vm2130, %v2136, 0.0
      %2138 = vadd.xlane.f32.xlu0 %v2137
      %v2139 = vpop.xlane.xlu0 %2138
      %v2140 = vrcp.pop %v2139
      %v2141 = vmul.f32 %v2139, %v2140
      %v2142 = vsub.f32 1.0, %v2141
      %v2143 = vmul.f32 %v2140, %v2142
      %v2144 = vadd.f32 %v2140, %v2143
      %vm2145 = vweird.f32 %v2139
      %vm2146 = vweird.f32 %v2140
      %vm2147 = vmor %vm2145, %vm2146
      %v2148 = vsel %vm2147, %v2140, %v2144
      %v2149 = vand.u32 2147483647, %v2139
      %vm2150 = vcmp.eq.f32.partialorder %v2149, 8.507059e+37
      %v2151 = vand.u32 %v2139, 2147483648
      %v2152 = vor.u32 1.1754944e-38, %v2151
      %v2153 = vsel %vm2150, %v2152, %v2148
      %v2154 = vmul.f32 %v2136, %v2153
      %2155 = vst [vmem:[#allocation2] sm:$0x3] %v2154
    $region21: #{tpu_custom_call.1} parent=1 // pred_fallthru
      _
    // Predicated region
    $region22: #{tpu_custom_call.1} parent=1 // pred_check
      _
    $region23: #{tpu_custom_call.1} parent=1 // pred_check_branch
      %2157 = sbr.rel (0) target = $region25
    $region24: #{tpu_custom_call.1} parent=1 // pred_region
      %2159 = vsyncadd [#allocation3], 0
      %s2161 = sshll.u32 [#allocation2], 4
      %s2162 = int_to_ptr.vmem [resolvable:$true] %s2161
      %s2163 = sshll.u32 %s4, 4
      %s2164 = int_to_ptr.hbm [resolvable:$true] %s2163
      %2166 = dma.vmem_to_hbm [thread:$0]  %s2162, 32, %s2164, [#allocation3]
    $region25: #{tpu_custom_call.1} parent=1 // pred_fallthru
      _
    // Predicated region
    $region26: #{tpu_custom_call.1} parent=1 // pred_check
      _
    $region27: #{tpu_custom_call.1} parent=1 // pred_check_branch
      %2168 = sbr.rel (0) target = $region29
    $region28: #{tpu_custom_call.1} parent=1 // pred_region
      %2170 = dma.done [#allocation3], 32
    $region29: #{tpu_custom_call.1} parent=1 // pred_fallthru
      _
    %2171 = vsyncpa [#allocation3], 1

</llo_original>
